<compile_context>
chip_gen: v6e
topology: v6e:2x2x1
jax: 0.10.0
libtpu: 0.0.40
codegen_flags: <defaults>
</compile_context>

<pallas_src>
import math
from functools import partial

import numpy as np
import jax
import jax.numpy as jnp
from jax.experimental import pallas as pl
from jax.experimental.pallas import tpu as pltpu  # noqa: F401  (kept for template completeness)


# ----------------------------- slab layouts (row offsets, 8-row aligned) ----------------------
def _w_slab_layout(H):
    o, r = {}, 0
    o["w_enc_h"] = r;   r += H       # (H, 4H)   encoder recurrent gate weights (perm i|f|o|g)
    o["w_qkv"] = r;     r += H       # (H, 3H)   fused QKV with LayerNorm gamma folded in
    o["w_misc"] = r;    r += H       # cols 0:H = attention out-proj W_o, cols H:H+2 = pos head
    o["w_att2dec"] = r; r += H       # (H, 4H)   proj_dec_h0 folded into decoder step-0 gates
    o["w_dec"] = r;     r += H       # (H, 4H)   decoder recurrent gates with pos head folded in
    o["bias"] = r;      r += 8       # rows: b_qkv | b_o | b_dec_fused | b_pos | 0...
    o["rows"] = r
    return o


def _d_slab_layout(T, A_pad):
    o, r = {}, 0
    o["xg_enc"] = r;  r += T * A_pad   # encoder gate x-contribution (+ bias), all timesteps
    o["xg_dec0"] = r; r += A_pad       # decoder step-0 x-contribution (+ folded biases)
    o["keep"] = r;    r += T * A_pad   # one-hot "encodings[length-1]" keep masks, cols 0:H
    o["misc"] = r;    r += A_pad       # cols 0:2 = decode_start_pos
    o["att"] = r;     r += A_pad       # cols 0:A_pad = additive attention bias (0 / -1e9)
    o["rows"] = r
    return o


# ----------------------------- fused CAM kernel factory ---------------------------------------
def _make_cam_kernel(T, H, steps, scale, A_pad):
    H2, H3, H4 = 2 * H, 3 * H, 4 * H
    wl = _w_slab_layout(H)
    dl = _d_slab_layout(T, A_pad)

    def _cell(gates, c):
        # gate columns are host-permuted to i|f|o|g: one sigmoid over 3H lanes + one tanh.
        ifo = jax.nn.sigmoid(gates[:, :H3])
        g = jnp.tanh(gates[:, H3:H4])
        c_new = ifo[:, H:H2] * c + ifo[:, :H] * g
        h_new = ifo[:, H2:H3] * jnp.tanh(c_new)
        return h_new, c_new

    def kernel(d_ref, w_ref, out_ref):
        f32 = jnp.float32

        # ---------------- encoder LSTM (fully unrolled over T, state in vregs) ---------------
        w_enc_h = w_ref[wl["w_enc_h"]:wl["w_enc_h"] + H, :H4]
        h = jnp.zeros((A_pad, H), f32)
        c = jnp.zeros((A_pad, H), f32)
        kept = jnp.zeros((A_pad, H), f32)
        for t in range(T):
            r = dl["xg_enc"] + t * A_pad
            gates = d_ref[r:r + A_pad, :H4] + jnp.dot(h, w_enc_h, preferred_element_type=f32)
            h, c = _cell(gates, c)
            # pack_padded / encodings[length-1] selection via precomputed one-hot masks
            # (assumes right-padded sequences with 1 <= len <= T).
            k = dl["keep"] + t * A_pad
            kept = kept + d_ref[k:k + A_pad, :H] * h

        # ---------------- LayerNorm + cross-agent self attention (1 head) --------------------
        x = kept                                                  # agent_lstm_encoding (A, H)
        mu = jnp.mean(x, axis=-1, keepdims=True)
        var = jnp.mean(jnp.square(x - mu), axis=-1, keepdims=True)
        norm = (x - mu) * jax.lax.rsqrt(var + 1e-6)
        # LN gamma/beta folded into the fused QKV projection (host-side).
        qkv = (jnp.dot(norm, w_ref[wl["w_qkv"]:wl["w_qkv"] + H, :H3],
                       preferred_element_type=f32)
               + w_ref[wl["bias"] + 0:wl["bias"] + 1, :H3])
        q = qkv[:, :H]
        k_ = qkv[:, H:H2]
        v = qkv[:, H2:H3]
        scores = jax.lax.dot_general(q, k_, (((1,), (1,)), ((), ())),
                                     preferred_element_type=f32) * scale
        scores = scores + d_ref[dl["att"]:dl["att"] + A_pad, :A_pad]   # additive 0/-1e9 bias
        s_max = jnp.max(scores, axis=-1, keepdims=True)
        e = jnp.exp(scores - s_max)
        # NOTE: approximate reciprocal -> attention probs sum to 1 within ~1e-3 (inference OK).
        probs = e * pl.reciprocal(jnp.sum(e, axis=-1, keepdims=True), approx=True)
        # TODO(synk): attention dropout (p=0.1) and rnn dropout are eval-mode no-ops, omitted.
        att = jnp.dot(probs, v, preferred_element_type=f32)
        attended = (x
                    + jnp.dot(att, w_ref[wl["w_misc"]:wl["w_misc"] + H, :H],
                              preferred_element_type=f32)
                    + w_ref[wl["bias"] + 1:wl["bias"] + 2, :H])

        # ---------------- decoder LSTM (unrolled; ONE matmul per step) ------------------------
        # step 0: init_h = proj_dec_h0(attended) only enters through the gates, so proj_dec_h0
        # is folded into w_att2dec; the x-side (vel0 embedding + all biases) is precomputed.
        c = jnp.zeros((A_pad, H), f32)
        gates = (d_ref[dl["xg_dec0"]:dl["xg_dec0"] + A_pad, :H4]
                 + jnp.dot(attended, w_ref[wl["w_att2dec"]:wl["w_att2dec"] + H, :H4],
                           preferred_element_type=f32))
        h, c = _cell(gates, c)
        hs = [h]
        # steps >= 1: rel_in = h @ w_pos + b_pos is folded into w_dec / b_dec (host-side).
        w_dec = w_ref[wl["w_dec"]:wl["w_dec"] + H, :H4]
        b_dec = jnp.broadcast_to(w_ref[wl["bias"] + 2:wl["bias"] + 3, :H4], (A_pad, H4))
        for s in range(1, steps):
            gates = jnp.dot(h, w_dec, preferred_element_type=f32) + b_dec
            h, c = _cell(gates, c)
            hs.append(h)

        # ---------------- batched position head + single writeback ---------------------------
        h_all = jnp.concatenate(hs, axis=0)                           # (steps*A_pad, H)
        rel = (jnp.dot(h_all, w_ref[wl["w_misc"]:wl["w_misc"] + H, H:H + 2],
                       preferred_element_type=f32)
               + w_ref[wl["bias"] + 3:wl["bias"] + 4, :2])            # (steps*A_pad, 2)
        p = d_ref[dl["misc"]:dl["misc"] + A_pad, :2]                  # decode_start_pos
        outs = []
        for s in range(steps):
            p = p + rel[s * A_pad:(s + 1) * A_pad]
            outs.append(p)
        out_ref[...] = jnp.concatenate(outs, axis=0)                  # one HBM writeback

    return kernel


# ----------------------------- jitted wrapper ---------------------------------------------------
@partial(jax.jit, static_argnums=(6, 7))
def _cam_forward_core(folded, past_traj, past_traj_len, att_bias, pos0, vel0,
                      decoding_steps, A_pad):
    A, T, _ = past_traj.shape
    H = folded["w_enc_x"].shape[1] // 4
    W = folded["w_slab"].shape[1]
    pad = A_pad - A
    f32 = jnp.float32
    dl = _d_slab_layout(T, A_pad)

    # time-major agent inputs, padded to a full sublane tile, then the encoder gate
    # x-contribution for ALL timesteps as one lane-dense (T*A_pad, 4H) matmul (plain XLA).
    x = jnp.transpose(past_traj, (1, 0, 2))                            # == .permute(1, 0, 2)
    x = jnp.pad(x, ((0, 0), (0, pad), (0, 0))).reshape(T * A_pad, 2)
    xg_enc = x @ folded["w_enc_x"] + folded["b_enc"]                   # (T*A_pad, 4H)

    vel0p = jnp.pad(vel0, ((0, pad), (0, 0)))
    xg_dec0 = vel0p @ folded["w_dec_x"] + folded["b_dec0"]             # (A_pad, 4H)
    pos0p = jnp.pad(pos0, ((0, pad), (0, 0)))                          # (A_pad, 2)

    # one-hot keep masks for the "encodings[length-1]" selection (padded agents -> len 1)
    lens = jnp.pad(past_traj_len.astype(jnp.int32), (0, pad), constant_values=1)
    t_idx = jnp.arange(1, T + 1, dtype=jnp.int32)
    keep = (t_idx[:, None] == lens[None, :]).astype(f32)               # (T, A_pad)
    keep = jnp.broadcast_to(keep.reshape(T * A_pad, 1), (T * A_pad, H))

    # pack all per-call data into one slab -> a single input DMA
    dslab = jnp.zeros((dl["rows"], W), f32)
    dslab = dslab.at[dl["xg_enc"]:dl["xg_enc"] + T * A_pad, :4 * H].set(xg_enc)
    dslab = dslab.at[dl["xg_dec0"]:dl["xg_dec0"] + A_pad, :4 * H].set(xg_dec0)
    dslab = dslab.at[dl["keep"]:dl["keep"] + T * A_pad, :H].set(keep)
    dslab = dslab.at[dl["misc"]:dl["misc"] + A_pad, :2].set(pos0p)
    dslab = dslab.at[dl["att"]:dl["att"] + A_pad, :A_pad].set(att_bias)

    scale = 1.0 / math.sqrt(H)          # d_k = attention_features = H (att_heads == 1)
    kernel = _make_cam_kernel(T, H, decoding_steps, scale, A_pad)

    gen = pl.pallas_call(
        kernel,
        out_shape=jax.ShapeDtypeStruct((decoding_steps * A_pad, 2), f32),
    )(dslab, folded["w_slab"])

    # (steps*A_pad, 2) -> drop padded agents -> (A, 1, steps, 2)
    # (== gen_traj.transpose(0, 1).unsqueeze(1))
    gen = gen.reshape(decoding_steps, A_pad, 2)
    return jnp.transpose(gen[:, :A], (1, 0, 2))[:, None]


def cam_forward(folded, past_traj, past_traj_len, past_num_agents,
                decode_start_pos, decode_start_vel, decoding_steps):
    A = past_traj.shape[0]
    num_np = np.asarray(past_num_agents)
    assert int(num_np.sum()) == A, "The number of total agent is wrong."
    A_pad = int(pl.cdiv(A, 8)) * 8
    assert A_pad <= folded["w_slab"].shape[1]

    # block-diagonal per-scene attention mask as an ADDITIVE bias (0 same scene / -1e9 else);
    # padded agents fully masked.
    scene_id = np.repeat(np.arange(len(num_np)), num_np)
    bias = np.full((A_pad, A_pad), -1e9, np.float32)
    bias[:A, :A] = np.where(scene_id[:, None] == scene_id[None, :], 0.0, -1e9)

    return _cam_forward_core(folded, past_traj, past_traj_len, jnp.asarray(bias),
                             decode_start_pos, decode_start_vel,
                             int(decoding_steps), A_pad)


# ----------------------------- deterministic parameter init + host-side weight folding ---------
def init_params(key, H):
    D = H  # enc_input_size == enc_rnn_hidden_size == motion_features
    ks = jax.random.split(key, 16)

    def lin(k, fan_in, fan_out):
        return jax.random.normal(k, (fan_in, fan_out), jnp.float32) / np.sqrt(fan_in)

    p = {}
    # encoder (Linear(2->D) input embedding + LSTM)
    p["enc_wemb"] = lin(ks[0], 2, D)
    p["enc_bemb"] = jnp.zeros((1, D), jnp.float32)
    p["enc_wih"] = lin(ks[1], D, 4 * H)
    p["enc_whh"] = lin(ks[2], H, 4 * H)
    p["enc_b"] = 0.01 * jax.random.normal(ks[3], (1, 4 * H), jnp.float32)
    # layer norm
    p["ln_gamma"] = jnp.ones((1, H), jnp.float32)
    p["ln_beta"] = jnp.zeros((1, H), jnp.float32)
    # self attention (1 head, d_k = H)
    p["att_wq"] = lin(ks[4], H, H); p["att_bq"] = jnp.zeros((1, H), jnp.float32)
    p["att_wk"] = lin(ks[5], H, H); p["att_bk"] = jnp.zeros((1, H), jnp.float32)
    p["att_wv"] = lin(ks[6], H, H); p["att_bv"] = jnp.zeros((1, H), jnp.float32)
    p["att_wo"] = lin(ks[7], H, H); p["att_bo"] = jnp.zeros((1, H), jnp.float32)
    # decoder
    p["proj_w"] = lin(ks[8], H, H); p["proj_b"] = jnp.zeros((1, H), jnp.float32)
    p["dec_wemb"] = lin(ks[9], 2, D); p["dec_bemb"] = jnp.zeros((1, D), jnp.float32)
    p["dec_wih"] = lin(ks[10], D, 4 * H)
    p["dec_whh"] = lin(ks[11], H, 4 * H)
    p["dec_b"] = 0.01 * jax.random.normal(ks[12], (1, 4 * H), jnp.float32)
    p["dec_wpos"] = lin(ks[13], H, 2); p["dec_bpos"] = jnp.zeros((1, 2), jnp.float32)
    return p


def fold_params(p):
    """One-time host-side folding + packing into a single (rows, 128) weight slab:
       - input embeddings -> LSTM gate weights,
       - LN gamma/beta -> fused QKV projection,
       - proj_dec_h0 -> decoder step-0 h-side gate weights,
       - decoder position head -> decoder recurrent gate weights (1 matmul/step),
       - gate columns reordered i|f|g|o -> i|f|o|g."""
    H = p["enc_whh"].shape[0]
    W = max(128, -(-4 * H // 128) * 128)

    def perm(w):  # i|f|g|o -> i|f|o|g along the last (4H) axis
        return jnp.concatenate([w[..., :H], w[..., H:2 * H],
                                w[..., 3 * H:4 * H], w[..., 2 * H:3 * H]], axis=-1)

    # encoder
    w_enc_x = perm(p["enc_wemb"] @ p["enc_wih"])                       # (2, 4H)
    b_enc = perm(p["enc_b"] + p["enc_bemb"] @ p["enc_wih"])            # (1, 4H)
    w_enc_h = perm(p["enc_whh"])                                       # (H, 4H)

    # attention: fused QKV with LayerNorm folded in
    w_qkv = jnp.concatenate([p["att_wq"], p["att_wk"], p["att_wv"]], axis=1)   # (H, 3H)
    b_qkv = jnp.concatenate([p["att_bq"], p["att_bk"], p["att_bv"]], axis=1)   # (1, 3H)
    b_qkv = b_qkv + p["ln_beta"] @ w_qkv
    w_qkv = p["ln_gamma"].reshape(H, 1) * w_qkv

    # decoder (rnn_layers == 1)
    # TODO(synk): only rnn_layers == 1 is wired (single proj_dec_h0 projection).
    w_dec_x = perm(p["dec_wemb"] @ p["dec_wih"])                       # (2, 4H)
    b_dec = perm(p["dec_b"] + p["dec_bemb"] @ p["dec_wih"])            # (1, 4H)
    w_dec_h = perm(p["dec_whh"])                                       # (H, 4H)
    # step 0: init_h = attended @ w_proj + b_proj enters only through the gates
    w_att2dec = p["proj_w"] @ w_dec_h                                  # (H, 4H)
    b_dec0 = b_dec + p["proj_b"] @ w_dec_h                             # (1, 4H)
    # steps >= 1: rel_in = h @ w_pos + b_pos  ->  fold the position head into the recurrence
    w_dec_fused = w_dec_h + p["dec_wpos"] @ w_dec_x                    # (H, 4H)
    b_dec_fused = b_dec + p["dec_bpos"] @ w_dec_x                      # (1, 4H)

    wl = _w_slab_layout(H)
    slab = np.zeros((wl["rows"], W), np.float32)
    slab[wl["w_enc_h"]:wl["w_enc_h"] + H, :4 * H] = np.asarray(w_enc_h)
    slab[wl["w_qkv"]:wl["w_qkv"] + H, :3 * H] = np.asarray(w_qkv)
    slab[wl["w_misc"]:wl["w_misc"] + H, :H] = np.asarray(p["att_wo"])
    slab[wl["w_misc"]:wl["w_misc"] + H, H:H + 2] = np.asarray(p["dec_wpos"])
    slab[wl["w_att2dec"]:wl["w_att2dec"] + H, :4 * H] = np.asarray(w_att2dec)
    slab[wl["w_dec"]:wl["w_dec"] + H, :4 * H] = np.asarray(w_dec_fused)
    b = wl["bias"]
    slab[b + 0, :3 * H] = np.asarray(b_qkv)[0]
    slab[b + 1, :H] = np.asarray(p["att_bo"])[0]
    slab[b + 2, :4 * H] = np.asarray(b_dec_fused)[0]
    slab[b + 3, :2] = np.asarray(p["dec_bpos"])[0]

    return {
        "w_slab": jnp.asarray(slab),                                   # single weight DMA
        "w_enc_x": w_enc_x, "b_enc": b_enc,                            # used wrapper-side (XLA)
        "w_dec_x": w_dec_x, "b_dec0": b_dec0,                          # used wrapper-side (XLA)
    }


if __name__ == "__main__":
    key = jax.random.PRNGKey(0)
    H = 32                      # motion_features
    T = 8                       # past timesteps
    decoding_steps = 6
    past_num_agents = np.array([3, 3], dtype=np.int32)   # 2 scenes, 3 agents each
    A = int(past_num_agents.sum())

    kp, kd = jax.random.split(key)
    params = init_params(kp, H)
    folded = fold_params(params)

    k1, k2, k3 = jax.random.split(kd, 3)
    past_traj = jax.random.normal(k1, (A, T, 2), jnp.float32)
    past_traj_len = jnp.array([8, 7, 8, 6, 8, 5], dtype=jnp.int32)
    decode_start_pos = jax.random.normal(k2, (A, 2), jnp.float32)
    decode_start_vel = 0.1 * jax.random.normal(k3, (A, 2), jnp.float32)

    out = cam_forward(folded, past_traj, past_traj_len, past_num_agents,
                      decode_start_pos, decode_start_vel, decoding_steps)
    out = jax.block_until_ready(out)
    assert out.shape == (A, 1, decoding_steps, 2)
    assert bool(jnp.all(jnp.isfinite(out)))
    print("KERNEL_OK")
</pallas_src>

<mosaic_0001>
module attributes {stable_mosaic.version = 11 : i64} {
  func.func @kernel(%arg0: memref<152x128xf32, #tpu.memory_space<vmem>>, %arg1: memref<168x128xf32, #tpu.memory_space<vmem>>, %arg2: memref<48x2xf32, #tpu.memory_space<vmem>>) attributes {dimension_semantics = [], scalar_prefetch = 0 : i64, scratch_operands = 0 : i64, tpu.core_type = #tpu.core_type<tc>} {
    %c0 = arith.constant 0 : index
    %c0_0 = arith.constant 0 : index
    %0 = vector.load %arg1[%c0, %c0_0] : memref<168x128xf32, #tpu.memory_space<vmem>>, vector<32x128xf32>
    %cst = arith.constant 0.000000e+00 : f32
    %1 = vector.broadcast %cst : f32 to vector<8x32xf32>
    %cst_1 = arith.constant 0.000000e+00 : f32
    %2 = vector.broadcast %cst_1 : f32 to vector<8x32xf32>
    %cst_2 = arith.constant 0.000000e+00 : f32
    %3 = vector.broadcast %cst_2 : f32 to vector<8x32xf32>
    %c0_3 = arith.constant 0 : index
    %c0_4 = arith.constant 0 : index
    %4 = vector.load %arg0[%c0_3, %c0_4] : memref<152x128xf32, #tpu.memory_space<vmem>>, vector<8x128xf32>
    %cst_5 = arith.constant dense<0.000000e+00> : vector<8x128xf32>
    %5 = tpu.matmul %1, %0, %cst_5 {dimension_numbers = #tpu.dot_dimension_numbers<[1], [0], [0], [1], [0, 0, 1, 1], [], []>} : vector<8x32xf32>, vector<32x128xf32>, vector<8x128xf32> -> vector<8x128xf32>
    %6 = arith.addf %4, %5 : vector<8x128xf32>
    %7 = vector.extract_strided_slice %6 {offsets = [0, 0], sizes = [8, 96], strides = [1, 1]} : vector<8x128xf32> to vector<8x96xf32>
    %8 = arith.negf %7 : vector<8x96xf32>
    %9 = math.exp %8 : vector<8x96xf32>
    %cst_6 = arith.constant 1.000000e+00 : f32
    %10 = vector.broadcast %cst_6 : f32 to vector<8x96xf32>
    %11 = arith.addf %10, %9 : vector<8x96xf32>
    %12 = arith.divf %10, %11 : vector<8x96xf32>
    %13 = vector.extract_strided_slice %6 {offsets = [0, 96], sizes = [8, 32], strides = [1, 1]} : vector<8x128xf32> to vector<8x32xf32>
    %14 = math.tanh %13 : vector<8x32xf32>
    %15 = vector.extract_strided_slice %12 {offsets = [0, 32], sizes = [8, 32], strides = [1, 1]} : vector<8x96xf32> to vector<8x32xf32>
    %16 = arith.mulf %15, %2 : vector<8x32xf32>
    %17 = vector.extract_strided_slice %12 {offsets = [0, 0], sizes = [8, 32], strides = [1, 1]} : vector<8x96xf32> to vector<8x32xf32>
    %18 = arith.mulf %17, %14 : vector<8x32xf32>
    %19 = arith.addf %16, %18 : vector<8x32xf32>
    %20 = vector.extract_strided_slice %12 {offsets = [0, 64], sizes = [8, 32], strides = [1, 1]} : vector<8x96xf32> to vector<8x32xf32>
    %21 = math.tanh %19 : vector<8x32xf32>
    %22 = arith.mulf %20, %21 : vector<8x32xf32>
    %c72 = arith.constant 72 : index
    %c0_7 = arith.constant 0 : index
    %23 = vector.load %arg0[%c72, %c0_7] : memref<152x128xf32, #tpu.memory_space<vmem>>, vector<8x32xf32>
    %24 = arith.mulf %23, %22 : vector<8x32xf32>
    %25 = arith.addf %3, %24 : vector<8x32xf32>
    %c8 = arith.constant 8 : index
    %c0_8 = arith.constant 0 : index
    %26 = vector.load %arg0[%c8, %c0_8] : memref<152x128xf32, #tpu.memory_space<vmem>>, vector<8x128xf32>
    %cst_9 = arith.constant dense<0.000000e+00> : vector<8x128xf32>
    %27 = tpu.matmul %22, %0, %cst_9 {dimension_numbers = #tpu.dot_dimension_numbers<[1], [0], [0], [1], [0, 0, 1, 1], [], []>} : vector<8x32xf32>, vector<32x128xf32>, vector<8x128xf32> -> vector<8x128xf32>
    %28 = arith.addf %26, %27 : vector<8x128xf32>
    %29 = vector.extract_strided_slice %28 {offsets = [0, 0], sizes = [8, 96], strides = [1, 1]} : vector<8x128xf32> to vector<8x96xf32>
    %30 = arith.negf %29 : vector<8x96xf32>
    %31 = math.exp %30 : vector<8x96xf32>
    %cst_10 = arith.constant 1.000000e+00 : f32
    %32 = vector.broadcast %cst_10 : f32 to vector<8x96xf32>
    %33 = arith.addf %32, %31 : vector<8x96xf32>
    %34 = arith.divf %32, %33 : vector<8x96xf32>
    %35 = vector.extract_strided_slice %28 {offsets = [0, 96], sizes = [8, 32], strides = [1, 1]} : vector<8x128xf32> to vector<8x32xf32>
    %36 = math.tanh %35 : vector<8x32xf32>
    %37 = vector.extract_strided_slice %34 {offsets = [0, 32], sizes = [8, 32], strides = [1, 1]} : vector<8x96xf32> to vector<8x32xf32>
    %38 = arith.mulf %37, %19 : vector<8x32xf32>
    %39 = vector.extract_strided_slice %34 {offsets = [0, 0], sizes = [8, 32], strides = [1, 1]} : vector<8x96xf32> to vector<8x32xf32>
    %40 = arith.mulf %39, %36 : vector<8x32xf32>
    %41 = arith.addf %38, %40 : vector<8x32xf32>
    %42 = vector.extract_strided_slice %34 {offsets = [0, 64], sizes = [8, 32], strides = [1, 1]} : vector<8x96xf32> to vector<8x32xf32>
    %43 = math.tanh %41 : vector<8x32xf32>
    %44 = arith.mulf %42, %43 : vector<8x32xf32>
    %c80 = arith.constant 80 : index
    %c0_11 = arith.constant 0 : index
    %45 = vector.load %arg0[%c80, %c0_11] : memref<152x128xf32, #tpu.memory_space<vmem>>, vector<8x32xf32>
    %46 = arith.mulf %45, %44 : vector<8x32xf32>
    %47 = arith.addf %25, %46 : vector<8x32xf32>
    %c16 = arith.constant 16 : index
    %c0_12 = arith.constant 0 : index
    %48 = vector.load %arg0[%c16, %c0_12] : memref<152x128xf32, #tpu.memory_space<vmem>>, vector<8x128xf32>
    %cst_13 = arith.constant dense<0.000000e+00> : vector<8x128xf32>
    %49 = tpu.matmul %44, %0, %cst_13 {dimension_numbers = #tpu.dot_dimension_numbers<[1], [0], [0], [1], [0, 0, 1, 1], [], []>} : vector<8x32xf32>, vector<32x128xf32>, vector<8x128xf32> -> vector<8x128xf32>
    %50 = arith.addf %48, %49 : vector<8x128xf32>
    %51 = vector.extract_strided_slice %50 {offsets = [0, 0], sizes = [8, 96], strides = [1, 1]} : vector<8x128xf32> to vector<8x96xf32>
    %52 = arith.negf %51 : vector<8x96xf32>
    %53 = math.exp %52 : vector<8x96xf32>
    %cst_14 = arith.constant 1.000000e+00 : f32
    %54 = vector.broadcast %cst_14 : f32 to vector<8x96xf32>
    %55 = arith.addf %54, %53 : vector<8x96xf32>
    %56 = arith.divf %54, %55 : vector<8x96xf32>
    %57 = vector.extract_strided_slice %50 {offsets = [0, 96], sizes = [8, 32], strides = [1, 1]} : vector<8x128xf32> to vector<8x32xf32>
    %58 = math.tanh %57 : vector<8x32xf32>
    %59 = vector.extract_strided_slice %56 {offsets = [0, 32], sizes = [8, 32], strides = [1, 1]} : vector<8x96xf32> to vector<8x32xf32>
    %60 = arith.mulf %59, %41 : vector<8x32xf32>
    %61 = vector.extract_strided_slice %56 {offsets = [0, 0], sizes = [8, 32], strides = [1, 1]} : vector<8x96xf32> to vector<8x32xf32>
    %62 = arith.mulf %61, %58 : vector<8x32xf32>
    %63 = arith.addf %60, %62 : vector<8x32xf32>
    %64 = vector.extract_strided_slice %56 {offsets = [0, 64], sizes = [8, 32], strides = [1, 1]} : vector<8x96xf32> to vector<8x32xf32>
    %65 = math.tanh %63 : vector<8x32xf32>
    %66 = arith.mulf %64, %65 : vector<8x32xf32>
    %c88 = arith.constant 88 : index
    %c0_15 = arith.constant 0 : index
    %67 = vector.load %arg0[%c88, %c0_15] : memref<152x128xf32, #tpu.memory_space<vmem>>, vector<8x32xf32>
    %68 = arith.mulf %67, %66 : vector<8x32xf32>
    %69 = arith.addf %47, %68 : vector<8x32xf32>
    %c24 = arith.constant 24 : index
    %c0_16 = arith.constant 0 : index
    %70 = vector.load %arg0[%c24, %c0_16] : memref<152x128xf32, #tpu.memory_space<vmem>>, vector<8x128xf32>
    %cst_17 = arith.constant dense<0.000000e+00> : vector<8x128xf32>
    %71 = tpu.matmul %66, %0, %cst_17 {dimension_numbers = #tpu.dot_dimension_numbers<[1], [0], [0], [1], [0, 0, 1, 1], [], []>} : vector<8x32xf32>, vector<32x128xf32>, vector<8x128xf32> -> vector<8x128xf32>
    %72 = arith.addf %70, %71 : vector<8x128xf32>
    %73 = vector.extract_strided_slice %72 {offsets = [0, 0], sizes = [8, 96], strides = [1, 1]} : vector<8x128xf32> to vector<8x96xf32>
    %74 = arith.negf %73 : vector<8x96xf32>
    %75 = math.exp %74 : vector<8x96xf32>
    %cst_18 = arith.constant 1.000000e+00 : f32
    %76 = vector.broadcast %cst_18 : f32 to vector<8x96xf32>
    %77 = arith.addf %76, %75 : vector<8x96xf32>
    %78 = arith.divf %76, %77 : vector<8x96xf32>
    %79 = vector.extract_strided_slice %72 {offsets = [0, 96], sizes = [8, 32], strides = [1, 1]} : vector<8x128xf32> to vector<8x32xf32>
    %80 = math.tanh %79 : vector<8x32xf32>
    %81 = vector.extract_strided_slice %78 {offsets = [0, 32], sizes = [8, 32], strides = [1, 1]} : vector<8x96xf32> to vector<8x32xf32>
    %82 = arith.mulf %81, %63 : vector<8x32xf32>
    %83 = vector.extract_strided_slice %78 {offsets = [0, 0], sizes = [8, 32], strides = [1, 1]} : vector<8x96xf32> to vector<8x32xf32>
    %84 = arith.mulf %83, %80 : vector<8x32xf32>
    %85 = arith.addf %82, %84 : vector<8x32xf32>
    %86 = vector.extract_strided_slice %78 {offsets = [0, 64], sizes = [8, 32], strides = [1, 1]} : vector<8x96xf32> to vector<8x32xf32>
    %87 = math.tanh %85 : vector<8x32xf32>
    %88 = arith.mulf %86, %87 : vector<8x32xf32>
    %c96 = arith.constant 96 : index
    %c0_19 = arith.constant 0 : index
    %89 = vector.load %arg0[%c96, %c0_19] : memref<152x128xf32, #tpu.memory_space<vmem>>, vector<8x32xf32>
    %90 = arith.mulf %89, %88 : vector<8x32xf32>
    %91 = arith.addf %69, %90 : vector<8x32xf32>
    %c32 = arith.constant 32 : index
    %c0_20 = arith.constant 0 : index
    %92 = vector.load %arg0[%c32, %c0_20] : memref<152x128xf32, #tpu.memory_space<vmem>>, vector<8x128xf32>
    %cst_21 = arith.constant dense<0.000000e+00> : vector<8x128xf32>
    %93 = tpu.matmul %88, %0, %cst_21 {dimension_numbers = #tpu.dot_dimension_numbers<[1], [0], [0], [1], [0, 0, 1, 1], [], []>} : vector<8x32xf32>, vector<32x128xf32>, vector<8x128xf32> -> vector<8x128xf32>
    %94 = arith.addf %92, %93 : vector<8x128xf32>
    %95 = vector.extract_strided_slice %94 {offsets = [0, 0], sizes = [8, 96], strides = [1, 1]} : vector<8x128xf32> to vector<8x96xf32>
    %96 = arith.negf %95 : vector<8x96xf32>
    %97 = math.exp %96 : vector<8x96xf32>
    %cst_22 = arith.constant 1.000000e+00 : f32
    %98 = vector.broadcast %cst_22 : f32 to vector<8x96xf32>
    %99 = arith.addf %98, %97 : vector<8x96xf32>
    %100 = arith.divf %98, %99 : vector<8x96xf32>
    %101 = vector.extract_strided_slice %94 {offsets = [0, 96], sizes = [8, 32], strides = [1, 1]} : vector<8x128xf32> to vector<8x32xf32>
    %102 = math.tanh %101 : vector<8x32xf32>
    %103 = vector.extract_strided_slice %100 {offsets = [0, 32], sizes = [8, 32], strides = [1, 1]} : vector<8x96xf32> to vector<8x32xf32>
    %104 = arith.mulf %103, %85 : vector<8x32xf32>
    %105 = vector.extract_strided_slice %100 {offsets = [0, 0], sizes = [8, 32], strides = [1, 1]} : vector<8x96xf32> to vector<8x32xf32>
    %106 = arith.mulf %105, %102 : vector<8x32xf32>
    %107 = arith.addf %104, %106 : vector<8x32xf32>
    %108 = vector.extract_strided_slice %100 {offsets = [0, 64], sizes = [8, 32], strides = [1, 1]} : vector<8x96xf32> to vector<8x32xf32>
    %109 = math.tanh %107 : vector<8x32xf32>
    %110 = arith.mulf %108, %109 : vector<8x32xf32>
    %c104 = arith.constant 104 : index
    %c0_23 = arith.constant 0 : index
    %111 = vector.load %arg0[%c104, %c0_23] : memref<152x128xf32, #tpu.memory_space<vmem>>, vector<8x32xf32>
    %112 = arith.mulf %111, %110 : vector<8x32xf32>
    %113 = arith.addf %91, %112 : vector<8x32xf32>
    %c40 = arith.constant 40 : index
    %c0_24 = arith.constant 0 : index
    %114 = vector.load %arg0[%c40, %c0_24] : memref<152x128xf32, #tpu.memory_space<vmem>>, vector<8x128xf32>
    %cst_25 = arith.constant dense<0.000000e+00> : vector<8x128xf32>
    %115 = tpu.matmul %110, %0, %cst_25 {dimension_numbers = #tpu.dot_dimension_numbers<[1], [0], [0], [1], [0, 0, 1, 1], [], []>} : vector<8x32xf32>, vector<32x128xf32>, vector<8x128xf32> -> vector<8x128xf32>
    %116 = arith.addf %114, %115 : vector<8x128xf32>
    %117 = vector.extract_strided_slice %116 {offsets = [0, 0], sizes = [8, 96], strides = [1, 1]} : vector<8x128xf32> to vector<8x96xf32>
    %118 = arith.negf %117 : vector<8x96xf32>
    %119 = math.exp %118 : vector<8x96xf32>
    %cst_26 = arith.constant 1.000000e+00 : f32
    %120 = vector.broadcast %cst_26 : f32 to vector<8x96xf32>
    %121 = arith.addf %120, %119 : vector<8x96xf32>
    %122 = arith.divf %120, %121 : vector<8x96xf32>
    %123 = vector.extract_strided_slice %116 {offsets = [0, 96], sizes = [8, 32], strides = [1, 1]} : vector<8x128xf32> to vector<8x32xf32>
    %124 = math.tanh %123 : vector<8x32xf32>
    %125 = vector.extract_strided_slice %122 {offsets = [0, 32], sizes = [8, 32], strides = [1, 1]} : vector<8x96xf32> to vector<8x32xf32>
    %126 = arith.mulf %125, %107 : vector<8x32xf32>
    %127 = vector.extract_strided_slice %122 {offsets = [0, 0], sizes = [8, 32], strides = [1, 1]} : vector<8x96xf32> to vector<8x32xf32>
    %128 = arith.mulf %127, %124 : vector<8x32xf32>
    %129 = arith.addf %126, %128 : vector<8x32xf32>
    %130 = vector.extract_strided_slice %122 {offsets = [0, 64], sizes = [8, 32], strides = [1, 1]} : vector<8x96xf32> to vector<8x32xf32>
    %131 = math.tanh %129 : vector<8x32xf32>
    %132 = arith.mulf %130, %131 : vector<8x32xf32>
    %c112 = arith.constant 112 : index
    %c0_27 = arith.constant 0 : index
    %133 = vector.load %arg0[%c112, %c0_27] : memref<152x128xf32, #tpu.memory_space<vmem>>, vector<8x32xf32>
    %134 = arith.mulf %133, %132 : vector<8x32xf32>
    %135 = arith.addf %113, %134 : vector<8x32xf32>
    %c48 = arith.constant 48 : index
    %c0_28 = arith.constant 0 : index
    %136 = vector.load %arg0[%c48, %c0_28] : memref<152x128xf32, #tpu.memory_space<vmem>>, vector<8x128xf32>
    %cst_29 = arith.constant dense<0.000000e+00> : vector<8x128xf32>
    %137 = tpu.matmul %132, %0, %cst_29 {dimension_numbers = #tpu.dot_dimension_numbers<[1], [0], [0], [1], [0, 0, 1, 1], [], []>} : vector<8x32xf32>, vector<32x128xf32>, vector<8x128xf32> -> vector<8x128xf32>
    %138 = arith.addf %136, %137 : vector<8x128xf32>
    %139 = vector.extract_strided_slice %138 {offsets = [0, 0], sizes = [8, 96], strides = [1, 1]} : vector<8x128xf32> to vector<8x96xf32>
    %140 = arith.negf %139 : vector<8x96xf32>
    %141 = math.exp %140 : vector<8x96xf32>
    %cst_30 = arith.constant 1.000000e+00 : f32
    %142 = vector.broadcast %cst_30 : f32 to vector<8x96xf32>
    %143 = arith.addf %142, %141 : vector<8x96xf32>
    %144 = arith.divf %142, %143 : vector<8x96xf32>
    %145 = vector.extract_strided_slice %138 {offsets = [0, 96], sizes = [8, 32], strides = [1, 1]} : vector<8x128xf32> to vector<8x32xf32>
    %146 = math.tanh %145 : vector<8x32xf32>
    %147 = vector.extract_strided_slice %144 {offsets = [0, 32], sizes = [8, 32], strides = [1, 1]} : vector<8x96xf32> to vector<8x32xf32>
    %148 = arith.mulf %147, %129 : vector<8x32xf32>
    %149 = vector.extract_strided_slice %144 {offsets = [0, 0], sizes = [8, 32], strides = [1, 1]} : vector<8x96xf32> to vector<8x32xf32>
    %150 = arith.mulf %149, %146 : vector<8x32xf32>
    %151 = arith.addf %148, %150 : vector<8x32xf32>
    %152 = vector.extract_strided_slice %144 {offsets = [0, 64], sizes = [8, 32], strides = [1, 1]} : vector<8x96xf32> to vector<8x32xf32>
    %153 = math.tanh %151 : vector<8x32xf32>
    %154 = arith.mulf %152, %153 : vector<8x32xf32>
    %c120 = arith.constant 120 : index
    %c0_31 = arith.constant 0 : index
    %155 = vector.load %arg0[%c120, %c0_31] : memref<152x128xf32, #tpu.memory_space<vmem>>, vector<8x32xf32>
    %156 = arith.mulf %155, %154 : vector<8x32xf32>
    %157 = arith.addf %135, %156 : vector<8x32xf32>
    %c56 = arith.constant 56 : index
    %c0_32 = arith.constant 0 : index
    %158 = vector.load %arg0[%c56, %c0_32] : memref<152x128xf32, #tpu.memory_space<vmem>>, vector<8x128xf32>
    %cst_33 = arith.constant dense<0.000000e+00> : vector<8x128xf32>
    %159 = tpu.matmul %154, %0, %cst_33 {dimension_numbers = #tpu.dot_dimension_numbers<[1], [0], [0], [1], [0, 0, 1, 1], [], []>} : vector<8x32xf32>, vector<32x128xf32>, vector<8x128xf32> -> vector<8x128xf32>
    %160 = arith.addf %158, %159 : vector<8x128xf32>
    %161 = vector.extract_strided_slice %160 {offsets = [0, 0], sizes = [8, 96], strides = [1, 1]} : vector<8x128xf32> to vector<8x96xf32>
    %162 = arith.negf %161 : vector<8x96xf32>
    %163 = math.exp %162 : vector<8x96xf32>
    %cst_34 = arith.constant 1.000000e+00 : f32
    %164 = vector.broadcast %cst_34 : f32 to vector<8x96xf32>
    %165 = arith.addf %164, %163 : vector<8x96xf32>
    %166 = arith.divf %164, %165 : vector<8x96xf32>
    %167 = vector.extract_strided_slice %160 {offsets = [0, 96], sizes = [8, 32], strides = [1, 1]} : vector<8x128xf32> to vector<8x32xf32>
    %168 = math.tanh %167 : vector<8x32xf32>
    %169 = vector.extract_strided_slice %166 {offsets = [0, 32], sizes = [8, 32], strides = [1, 1]} : vector<8x96xf32> to vector<8x32xf32>
    %170 = arith.mulf %169, %151 : vector<8x32xf32>
    %171 = vector.extract_strided_slice %166 {offsets = [0, 0], sizes = [8, 32], strides = [1, 1]} : vector<8x96xf32> to vector<8x32xf32>
    %172 = arith.mulf %171, %168 : vector<8x32xf32>
    %173 = arith.addf %170, %172 : vector<8x32xf32>
    %174 = vector.extract_strided_slice %166 {offsets = [0, 64], sizes = [8, 32], strides = [1, 1]} : vector<8x96xf32> to vector<8x32xf32>
    %175 = math.tanh %173 : vector<8x32xf32>
    %176 = arith.mulf %174, %175 : vector<8x32xf32>
    %c128 = arith.constant 128 : index
    %c0_35 = arith.constant 0 : index
    %177 = vector.load %arg0[%c128, %c0_35] : memref<152x128xf32, #tpu.memory_space<vmem>>, vector<8x32xf32>
    %178 = arith.mulf %177, %176 : vector<8x32xf32>
    %179 = arith.addf %157, %178 : vector<8x32xf32>
    %cst_36 = arith.constant dense<0.000000e+00> : vector<8xf32>
    %180 = vector.multi_reduction <add>, %179, %cst_36 [1] : vector<8x32xf32> to vector<8xf32>
    %181 = vector.shape_cast %180 : vector<8xf32> to vector<8x1xf32>
    %cst_37 = arith.constant 3.200000e+01 : f32
    %182 = vector.broadcast %cst_37 : f32 to vector<8x1xf32>
    %183 = arith.divf %181, %182 : vector<8x1xf32>
    %184 = vector.broadcast %183 : vector<8x1xf32> to vector<8x32xf32>
    %185 = arith.subf %179, %184 : vector<8x32xf32>
    %186 = arith.mulf %185, %185 : vector<8x32xf32>
    %cst_38 = arith.constant dense<0.000000e+00> : vector<8xf32>
    %187 = vector.multi_reduction <add>, %186, %cst_38 [1] : vector<8x32xf32> to vector<8xf32>
    %188 = vector.shape_cast %187 : vector<8xf32> to vector<8x1xf32>
    %cst_39 = arith.constant 3.200000e+01 : f32
    %189 = vector.broadcast %cst_39 : f32 to vector<8x1xf32>
    %190 = arith.divf %188, %189 : vector<8x1xf32>
    %191 = vector.broadcast %183 : vector<8x1xf32> to vector<8x32xf32>
    %192 = arith.subf %179, %191 : vector<8x32xf32>
    %cst_40 = arith.constant 9.99999997E-7 : f32
    %193 = vector.broadcast %cst_40 : f32 to vector<8x1xf32>
    %194 = arith.addf %190, %193 : vector<8x1xf32>
    %195 = math.rsqrt %194 : vector<8x1xf32>
    %196 = vector.broadcast %195 : vector<8x1xf32> to vector<8x32xf32>
    %197 = arith.mulf %192, %196 : vector<8x32xf32>
    %c32_41 = arith.constant 32 : index
    %c0_42 = arith.constant 0 : index
    %198 = vector.load %arg1[%c32_41, %c0_42] : memref<168x128xf32, #tpu.memory_space<vmem>>, vector<32x96xf32>
    %cst_43 = arith.constant dense<0.000000e+00> : vector<8x96xf32>
    %199 = tpu.matmul %197, %198, %cst_43 {dimension_numbers = #tpu.dot_dimension_numbers<[1], [0], [0], [1], [0, 0, 1, 1], [], []>} : vector<8x32xf32>, vector<32x96xf32>, vector<8x96xf32> -> vector<8x96xf32>
    %c160 = arith.constant 160 : index
    %c0_44 = arith.constant 0 : index
    %200 = vector.load %arg1[%c160, %c0_44] : memref<168x128xf32, #tpu.memory_space<vmem>>, vector<1x96xf32>
    %201 = vector.broadcast %200 : vector<1x96xf32> to vector<8x96xf32>
    %202 = arith.addf %199, %201 : vector<8x96xf32>
    %203 = vector.extract_strided_slice %202 {offsets = [0, 0], sizes = [8, 32], strides = [1, 1]} : vector<8x96xf32> to vector<8x32xf32>
    %204 = vector.extract_strided_slice %202 {offsets = [0, 32], sizes = [8, 32], strides = [1, 1]} : vector<8x96xf32> to vector<8x32xf32>
    %205 = vector.extract_strided_slice %202 {offsets = [0, 64], sizes = [8, 32], strides = [1, 1]} : vector<8x96xf32> to vector<8x32xf32>
    %cst_45 = arith.constant dense<0.000000e+00> : vector<8x8xf32>
    %206 = tpu.matmul %203, %204, %cst_45 {dimension_numbers = #tpu.dot_dimension_numbers<[1], [1], [0], [0], [0, 0, 1, 0], [], []>} : vector<8x32xf32>, vector<8x32xf32>, vector<8x8xf32> -> vector<8x8xf32>
    %cst_46 = arith.constant 0.176776692 : f32
    %207 = vector.broadcast %cst_46 : f32 to vector<8x8xf32>
    %208 = arith.mulf %206, %207 : vector<8x8xf32>
    %c144 = arith.constant 144 : index
    %c0_47 = arith.constant 0 : index
    %209 = vector.load %arg0[%c144, %c0_47] : memref<152x128xf32, #tpu.memory_space<vmem>>, vector<8x8xf32>
    %210 = arith.addf %208, %209 : vector<8x8xf32>
    %cst_48 = arith.constant dense<0xFF800000> : vector<8xf32>
    %211 = vector.multi_reduction <maximumf>, %210, %cst_48 [1] : vector<8x8xf32> to vector<8xf32>
    %212 = vector.shape_cast %211 : vector<8xf32> to vector<8x1xf32>
    %213 = vector.broadcast %212 : vector<8x1xf32> to vector<8x8xf32>
    %214 = arith.subf %210, %213 : vector<8x8xf32>
    %215 = math.exp %214 : vector<8x8xf32>
    %cst_49 = arith.constant dense<0.000000e+00> : vector<8xf32>
    %216 = vector.multi_reduction <add>, %215, %cst_49 [1] : vector<8x8xf32> to vector<8xf32>
    %217 = vector.shape_cast %216 : vector<8xf32> to vector<8x1xf32>
    %218 = tpu.reciprocal %217 {approx = true} : vector<8x1xf32> -> vector<8x1xf32>
    %219 = vector.broadcast %218 : vector<8x1xf32> to vector<8x8xf32>
    %220 = arith.mulf %215, %219 : vector<8x8xf32>
    %cst_50 = arith.constant dense<0.000000e+00> : vector<8x32xf32>
    %221 = tpu.matmul %220, %205, %cst_50 {dimension_numbers = #tpu.dot_dimension_numbers<[1], [0], [0], [1], [0, 0, 1, 1], [], []>} : vector<8x8xf32>, vector<8x32xf32>, vector<8x32xf32> -> vector<8x32xf32>
    %c64 = arith.constant 64 : index
    %c0_51 = arith.constant 0 : index
    %222 = vector.load %arg1[%c64, %c0_51] : memref<168x128xf32, #tpu.memory_space<vmem>>, vector<32x32xf32>
    %cst_52 = arith.constant dense<0.000000e+00> : vector<8x32xf32>
    %223 = tpu.matmul %221, %222, %cst_52 {dimension_numbers = #tpu.dot_dimension_numbers<[1], [0], [0], [1], [0, 0, 1, 1], [], []>} : vector<8x32xf32>, vector<32x32xf32>, vector<8x32xf32> -> vector<8x32xf32>
    %224 = arith.addf %179, %223 : vector<8x32xf32>
    %c161 = arith.constant 161 : index
    %c0_53 = arith.constant 0 : index
    %225 = vector.load %arg1[%c161, %c0_53] : memref<168x128xf32, #tpu.memory_space<vmem>>, vector<1x32xf32>
    %226 = vector.broadcast %225 : vector<1x32xf32> to vector<8x32xf32>
    %227 = arith.addf %224, %226 : vector<8x32xf32>
    %cst_54 = arith.constant 0.000000e+00 : f32
    %228 = vector.broadcast %cst_54 : f32 to vector<8x32xf32>
    %c64_55 = arith.constant 64 : index
    %c0_56 = arith.constant 0 : index
    %229 = vector.load %arg0[%c64_55, %c0_56] : memref<152x128xf32, #tpu.memory_space<vmem>>, vector<8x128xf32>
    %c96_57 = arith.constant 96 : index
    %c0_58 = arith.constant 0 : index
    %230 = vector.load %arg1[%c96_57, %c0_58] : memref<168x128xf32, #tpu.memory_space<vmem>>, vector<32x128xf32>
    %cst_59 = arith.constant dense<0.000000e+00> : vector<8x128xf32>
    %231 = tpu.matmul %227, %230, %cst_59 {dimension_numbers = #tpu.dot_dimension_numbers<[1], [0], [0], [1], [0, 0, 1, 1], [], []>} : vector<8x32xf32>, vector<32x128xf32>, vector<8x128xf32> -> vector<8x128xf32>
    %232 = arith.addf %229, %231 : vector<8x128xf32>
    %233 = vector.extract_strided_slice %232 {offsets = [0, 0], sizes = [8, 96], strides = [1, 1]} : vector<8x128xf32> to vector<8x96xf32>
    %234 = arith.negf %233 : vector<8x96xf32>
    %235 = math.exp %234 : vector<8x96xf32>
    %cst_60 = arith.constant 1.000000e+00 : f32
    %236 = vector.broadcast %cst_60 : f32 to vector<8x96xf32>
    %237 = arith.addf %236, %235 : vector<8x96xf32>
    %238 = arith.divf %236, %237 : vector<8x96xf32>
    %239 = vector.extract_strided_slice %232 {offsets = [0, 96], sizes = [8, 32], strides = [1, 1]} : vector<8x128xf32> to vector<8x32xf32>
    %240 = math.tanh %239 : vector<8x32xf32>
    %241 = vector.extract_strided_slice %238 {offsets = [0, 32], sizes = [8, 32], strides = [1, 1]} : vector<8x96xf32> to vector<8x32xf32>
    %242 = arith.mulf %241, %228 : vector<8x32xf32>
    %243 = vector.extract_strided_slice %238 {offsets = [0, 0], sizes = [8, 32], strides = [1, 1]} : vector<8x96xf32> to vector<8x32xf32>
    %244 = arith.mulf %243, %240 : vector<8x32xf32>
    %245 = arith.addf %242, %244 : vector<8x32xf32>
    %246 = vector.extract_strided_slice %238 {offsets = [0, 64], sizes = [8, 32], strides = [1, 1]} : vector<8x96xf32> to vector<8x32xf32>
    %247 = math.tanh %245 : vector<8x32xf32>
    %248 = arith.mulf %246, %247 : vector<8x32xf32>
    %c128_61 = arith.constant 128 : index
    %c0_62 = arith.constant 0 : index
    %249 = vector.load %arg1[%c128_61, %c0_62] : memref<168x128xf32, #tpu.memory_space<vmem>>, vector<32x128xf32>
    %c162 = arith.constant 162 : index
    %c0_63 = arith.constant 0 : index
    %250 = vector.load %arg1[%c162, %c0_63] : memref<168x128xf32, #tpu.memory_space<vmem>>, vector<1x128xf32>
    %251 = vector.shape_cast %250 : vector<1x128xf32> to vector<1x128xf32>
    %252 = vector.broadcast %251 : vector<1x128xf32> to vector<8x128xf32>
    %cst_64 = arith.constant dense<0.000000e+00> : vector<8x128xf32>
    %253 = tpu.matmul %248, %249, %cst_64 {dimension_numbers = #tpu.dot_dimension_numbers<[1], [0], [0], [1], [0, 0, 1, 1], [], []>} : vector<8x32xf32>, vector<32x128xf32>, vector<8x128xf32> -> vector<8x128xf32>
    %254 = arith.addf %253, %252 : vector<8x128xf32>
    %255 = vector.extract_strided_slice %254 {offsets = [0, 0], sizes = [8, 96], strides = [1, 1]} : vector<8x128xf32> to vector<8x96xf32>
    %256 = arith.negf %255 : vector<8x96xf32>
    %257 = math.exp %256 : vector<8x96xf32>
    %cst_65 = arith.constant 1.000000e+00 : f32
    %258 = vector.broadcast %cst_65 : f32 to vector<8x96xf32>
    %259 = arith.addf %258, %257 : vector<8x96xf32>
    %260 = arith.divf %258, %259 : vector<8x96xf32>
    %261 = vector.extract_strided_slice %254 {offsets = [0, 96], sizes = [8, 32], strides = [1, 1]} : vector<8x128xf32> to vector<8x32xf32>
    %262 = math.tanh %261 : vector<8x32xf32>
    %263 = vector.extract_strided_slice %260 {offsets = [0, 32], sizes = [8, 32], strides = [1, 1]} : vector<8x96xf32> to vector<8x32xf32>
    %264 = arith.mulf %263, %245 : vector<8x32xf32>
    %265 = vector.extract_strided_slice %260 {offsets = [0, 0], sizes = [8, 32], strides = [1, 1]} : vector<8x96xf32> to vector<8x32xf32>
    %266 = arith.mulf %265, %262 : vector<8x32xf32>
    %267 = arith.addf %264, %266 : vector<8x32xf32>
    %268 = vector.extract_strided_slice %260 {offsets = [0, 64], sizes = [8, 32], strides = [1, 1]} : vector<8x96xf32> to vector<8x32xf32>
    %269 = math.tanh %267 : vector<8x32xf32>
    %270 = arith.mulf %268, %269 : vector<8x32xf32>
    %cst_66 = arith.constant dense<0.000000e+00> : vector<8x128xf32>
    %271 = tpu.matmul %270, %249, %cst_66 {dimension_numbers = #tpu.dot_dimension_numbers<[1], [0], [0], [1], [0, 0, 1, 1], [], []>} : vector<8x32xf32>, vector<32x128xf32>, vector<8x128xf32> -> vector<8x128xf32>
    %272 = arith.addf %271, %252 : vector<8x128xf32>
    %273 = vector.extract_strided_slice %272 {offsets = [0, 0], sizes = [8, 96], strides = [1, 1]} : vector<8x128xf32> to vector<8x96xf32>
    %274 = arith.negf %273 : vector<8x96xf32>
    %275 = math.exp %274 : vector<8x96xf32>
    %cst_67 = arith.constant 1.000000e+00 : f32
    %276 = vector.broadcast %cst_67 : f32 to vector<8x96xf32>
    %277 = arith.addf %276, %275 : vector<8x96xf32>
    %278 = arith.divf %276, %277 : vector<8x96xf32>
    %279 = vector.extract_strided_slice %272 {offsets = [0, 96], sizes = [8, 32], strides = [1, 1]} : vector<8x128xf32> to vector<8x32xf32>
    %280 = math.tanh %279 : vector<8x32xf32>
    %281 = vector.extract_strided_slice %278 {offsets = [0, 32], sizes = [8, 32], strides = [1, 1]} : vector<8x96xf32> to vector<8x32xf32>
    %282 = arith.mulf %281, %267 : vector<8x32xf32>
    %283 = vector.extract_strided_slice %278 {offsets = [0, 0], sizes = [8, 32], strides = [1, 1]} : vector<8x96xf32> to vector<8x32xf32>
    %284 = arith.mulf %283, %280 : vector<8x32xf32>
    %285 = arith.addf %282, %284 : vector<8x32xf32>
    %286 = vector.extract_strided_slice %278 {offsets = [0, 64], sizes = [8, 32], strides = [1, 1]} : vector<8x96xf32> to vector<8x32xf32>
    %287 = math.tanh %285 : vector<8x32xf32>
    %288 = arith.mulf %286, %287 : vector<8x32xf32>
    %cst_68 = arith.constant dense<0.000000e+00> : vector<8x128xf32>
    %289 = tpu.matmul %288, %249, %cst_68 {dimension_numbers = #tpu.dot_dimension_numbers<[1], [0], [0], [1], [0, 0, 1, 1], [], []>} : vector<8x32xf32>, vector<32x128xf32>, vector<8x128xf32> -> vector<8x128xf32>
    %290 = arith.addf %289, %252 : vector<8x128xf32>
    %291 = vector.extract_strided_slice %290 {offsets = [0, 0], sizes = [8, 96], strides = [1, 1]} : vector<8x128xf32> to vector<8x96xf32>
    %292 = arith.negf %291 : vector<8x96xf32>
    %293 = math.exp %292 : vector<8x96xf32>
    %cst_69 = arith.constant 1.000000e+00 : f32
    %294 = vector.broadcast %cst_69 : f32 to vector<8x96xf32>
    %295 = arith.addf %294, %293 : vector<8x96xf32>
    %296 = arith.divf %294, %295 : vector<8x96xf32>
    %297 = vector.extract_strided_slice %290 {offsets = [0, 96], sizes = [8, 32], strides = [1, 1]} : vector<8x128xf32> to vector<8x32xf32>
    %298 = math.tanh %297 : vector<8x32xf32>
    %299 = vector.extract_strided_slice %296 {offsets = [0, 32], sizes = [8, 32], strides = [1, 1]} : vector<8x96xf32> to vector<8x32xf32>
    %300 = arith.mulf %299, %285 : vector<8x32xf32>
    %301 = vector.extract_strided_slice %296 {offsets = [0, 0], sizes = [8, 32], strides = [1, 1]} : vector<8x96xf32> to vector<8x32xf32>
    %302 = arith.mulf %301, %298 : vector<8x32xf32>
    %303 = arith.addf %300, %302 : vector<8x32xf32>
    %304 = vector.extract_strided_slice %296 {offsets = [0, 64], sizes = [8, 32], strides = [1, 1]} : vector<8x96xf32> to vector<8x32xf32>
    %305 = math.tanh %303 : vector<8x32xf32>
    %306 = arith.mulf %304, %305 : vector<8x32xf32>
    %cst_70 = arith.constant dense<0.000000e+00> : vector<8x128xf32>
    %307 = tpu.matmul %306, %249, %cst_70 {dimension_numbers = #tpu.dot_dimension_numbers<[1], [0], [0], [1], [0, 0, 1, 1], [], []>} : vector<8x32xf32>, vector<32x128xf32>, vector<8x128xf32> -> vector<8x128xf32>
    %308 = arith.addf %307, %252 : vector<8x128xf32>
    %309 = vector.extract_strided_slice %308 {offsets = [0, 0], sizes = [8, 96], strides = [1, 1]} : vector<8x128xf32> to vector<8x96xf32>
    %310 = arith.negf %309 : vector<8x96xf32>
    %311 = math.exp %310 : vector<8x96xf32>
    %cst_71 = arith.constant 1.000000e+00 : f32
    %312 = vector.broadcast %cst_71 : f32 to vector<8x96xf32>
    %313 = arith.addf %312, %311 : vector<8x96xf32>
    %314 = arith.divf %312, %313 : vector<8x96xf32>
    %315 = vector.extract_strided_slice %308 {offsets = [0, 96], sizes = [8, 32], strides = [1, 1]} : vector<8x128xf32> to vector<8x32xf32>
    %316 = math.tanh %315 : vector<8x32xf32>
    %317 = vector.extract_strided_slice %314 {offsets = [0, 32], sizes = [8, 32], strides = [1, 1]} : vector<8x96xf32> to vector<8x32xf32>
    %318 = arith.mulf %317, %303 : vector<8x32xf32>
    %319 = vector.extract_strided_slice %314 {offsets = [0, 0], sizes = [8, 32], strides = [1, 1]} : vector<8x96xf32> to vector<8x32xf32>
    %320 = arith.mulf %319, %316 : vector<8x32xf32>
    %321 = arith.addf %318, %320 : vector<8x32xf32>
    %322 = vector.extract_strided_slice %314 {offsets = [0, 64], sizes = [8, 32], strides = [1, 1]} : vector<8x96xf32> to vector<8x32xf32>
    %323 = math.tanh %321 : vector<8x32xf32>
    %324 = arith.mulf %322, %323 : vector<8x32xf32>
    %cst_72 = arith.constant dense<0.000000e+00> : vector<8x128xf32>
    %325 = tpu.matmul %324, %249, %cst_72 {dimension_numbers = #tpu.dot_dimension_numbers<[1], [0], [0], [1], [0, 0, 1, 1], [], []>} : vector<8x32xf32>, vector<32x128xf32>, vector<8x128xf32> -> vector<8x128xf32>
    %326 = arith.addf %325, %252 : vector<8x128xf32>
    %327 = vector.extract_strided_slice %326 {offsets = [0, 0], sizes = [8, 96], strides = [1, 1]} : vector<8x128xf32> to vector<8x96xf32>
    %328 = arith.negf %327 : vector<8x96xf32>
    %329 = math.exp %328 : vector<8x96xf32>
    %cst_73 = arith.constant 1.000000e+00 : f32
    %330 = vector.broadcast %cst_73 : f32 to vector<8x96xf32>
    %331 = arith.addf %330, %329 : vector<8x96xf32>
    %332 = arith.divf %330, %331 : vector<8x96xf32>
    %333 = vector.extract_strided_slice %326 {offsets = [0, 96], sizes = [8, 32], strides = [1, 1]} : vector<8x128xf32> to vector<8x32xf32>
    %334 = math.tanh %333 : vector<8x32xf32>
    %335 = vector.extract_strided_slice %332 {offsets = [0, 32], sizes = [8, 32], strides = [1, 1]} : vector<8x96xf32> to vector<8x32xf32>
    %336 = arith.mulf %335, %321 : vector<8x32xf32>
    %337 = vector.extract_strided_slice %332 {offsets = [0, 0], sizes = [8, 32], strides = [1, 1]} : vector<8x96xf32> to vector<8x32xf32>
    %338 = arith.mulf %337, %334 : vector<8x32xf32>
    %339 = arith.addf %336, %338 : vector<8x32xf32>
    %340 = vector.extract_strided_slice %332 {offsets = [0, 64], sizes = [8, 32], strides = [1, 1]} : vector<8x96xf32> to vector<8x32xf32>
    %341 = math.tanh %339 : vector<8x32xf32>
    %342 = arith.mulf %340, %341 : vector<8x32xf32>
    %343 = tpu.concatenate %248, %270, %288, %306, %324, %342 in 0 : vector<8x32xf32>, vector<8x32xf32>, vector<8x32xf32>, vector<8x32xf32>, vector<8x32xf32>, vector<8x32xf32> -> vector<48x32xf32>
    %c64_74 = arith.constant 64 : index
    %c32_75 = arith.constant 32 : index
    %344 = vector.load %arg1[%c64_74, %c32_75] : memref<168x128xf32, #tpu.memory_space<vmem>>, vector<32x2xf32>
    %cst_76 = arith.constant dense<0.000000e+00> : vector<48x2xf32>
    %345 = tpu.matmul %343, %344, %cst_76 {dimension_numbers = #tpu.dot_dimension_numbers<[1], [0], [0], [1], [0, 0, 1, 1], [], []>} : vector<48x32xf32>, vector<32x2xf32>, vector<48x2xf32> -> vector<48x2xf32>
    %c163 = arith.constant 163 : index
    %c0_77 = arith.constant 0 : index
    %346 = vector.load %arg1[%c163, %c0_77] : memref<168x128xf32, #tpu.memory_space<vmem>>, vector<1x2xf32>
    %347 = vector.broadcast %346 : vector<1x2xf32> to vector<48x2xf32>
    %348 = arith.addf %345, %347 : vector<48x2xf32>
    %c136 = arith.constant 136 : index
    %c0_78 = arith.constant 0 : index
    %349 = vector.load %arg0[%c136, %c0_78] : memref<152x128xf32, #tpu.memory_space<vmem>>, vector<8x2xf32>
    %350 = vector.extract_strided_slice %348 {offsets = [0, 0], sizes = [8, 2], strides = [1, 1]} : vector<48x2xf32> to vector<8x2xf32>
    %351 = arith.addf %349, %350 : vector<8x2xf32>
    %352 = vector.extract_strided_slice %348 {offsets = [8, 0], sizes = [8, 2], strides = [1, 1]} : vector<48x2xf32> to vector<8x2xf32>
    %353 = arith.addf %351, %352 : vector<8x2xf32>
    %354 = vector.extract_strided_slice %348 {offsets = [16, 0], sizes = [8, 2], strides = [1, 1]} : vector<48x2xf32> to vector<8x2xf32>
    %355 = arith.addf %353, %354 : vector<8x2xf32>
    %356 = vector.extract_strided_slice %348 {offsets = [24, 0], sizes = [8, 2], strides = [1, 1]} : vector<48x2xf32> to vector<8x2xf32>
    %357 = arith.addf %355, %356 : vector<8x2xf32>
    %358 = vector.extract_strided_slice %348 {offsets = [32, 0], sizes = [8, 2], strides = [1, 1]} : vector<48x2xf32> to vector<8x2xf32>
    %359 = arith.addf %357, %358 : vector<8x2xf32>
    %360 = vector.extract_strided_slice %348 {offsets = [40, 0], sizes = [8, 2], strides = [1, 1]} : vector<48x2xf32> to vector<8x2xf32>
    %361 = arith.addf %359, %360 : vector<8x2xf32>
    %362 = tpu.concatenate %351, %353, %355, %357, %359, %361 in 0 : vector<8x2xf32>, vector<8x2xf32>, vector<8x2xf32>, vector<8x2xf32>, vector<8x2xf32>, vector<8x2xf32> -> vector<48x2xf32>
    %c0_79 = arith.constant 0 : index
    %c0_80 = arith.constant 0 : index
    %363 = vector.load %arg2[%c0_79, %c0_80] : memref<48x2xf32, #tpu.memory_space<vmem>>, vector<48x2xf32>
    tpu.vector_store %arg2[%c0_79, %c0_80], %362 {strides = array<i32>} : memref<48x2xf32, #tpu.memory_space<vmem>>, vector<48x2xf32>,
    return
  }
}

</mosaic_0001>

<llo_original>
// kernel: _cam_forward_core.1
$region0: #{_cam_forward_core.1}
  #allocation0 [shape = 'u32[]', space=smem, size = 0x4, offset = 0x4, fixed_abs, tag = 'smem constant byte address 0x4 - core index']
  #allocation1 [shape = 'u32[144,128]{1,0:T(1,128)}', space=vmem, size = 0x12000, scoped, tag = 'internal scratch']
  %s0 = inlined_call_operand.vmem [shape: f32[152,128], index: 0, kind: input, shape index: {}]
  %s1 = inlined_call_operand.vmem [shape: f32[168,128], index: 1, kind: input, shape index: {}]
  %s2 = inlined_call_operand.vmem [shape: f32[48,2], index: 2, kind: output, shape index: {}]
  %s3 = sld [smem:[#allocation0]]
  $region18: #{_cam_forward_core.1} parent=0
    _
  %s5 = ssub.s32 1, %s3
  %s6 = scalar_select 0, %s5, %s3
  // Predicated region
  $region2: #{_cam_forward_core.1} parent=0 // pred_check
    _
  $region3: #{_cam_forward_core.1} parent=0 // pred_check_branch
    %8 = sbr.rel (0) target = $region5
  $region4: #{_cam_forward_core.1} parent=0 // pred_region
    _
  $region5: #{_cam_forward_core.1} parent=0 // pred_fallthru
    _
  // Predicated region
  $region6: #{_cam_forward_core.1} parent=0 // pred_check
    _
  $region7: #{_cam_forward_core.1} parent=0 // pred_check_branch
    %10 = sbr.rel (0) target = $region9
  $region8: #{_cam_forward_core.1} parent=0 // pred_region
    _
  $region9: #{_cam_forward_core.1} parent=0 // pred_fallthru
    _
  %v11 = vld [vmem:[%s1] sm:$0xff]
  %v12 = vld [vmem:[%s1 + $0x8] sm:$0xff]
  %v13 = vld [vmem:[%s1 + $0x10] sm:$0xff]
  %v14 = vld [vmem:[%s1 + $0x18] sm:$0xff]
  %v15 = vld [vmem:[%s0] sm:$0xff]
  %vm16 = vcmask 261120
  %v18 = vsel %vm16, 0.0, 0
  %20 = vmatprep.subr.mxu0 0.0
  %21 = vmatpush1.msra.mxu0 0.0
  %22 = vmatprep.subr.mxu0 0.0
  %23 = vmatpush1.msra.mxu0 0.0
  %24 = vmatprep.subr.mxu0 0.0
  %25 = vmatpush1.msra.mxu0 0.0
  %26 = vmatprep.subr.mxu0 0.0
  %27 = vmatpush1.msra.mxu0 0.0
  %28 = vmatprep.subr.mxu0 0.0
  %29 = vmatpush1.msra.mxu0 0.0
  %30 = vmatprep.subr.mxu0 0.0
  %31 = vmatpush1.msra.mxu0 0.0
  %32 = vmatprep.subr.mxu0 0.0
  %33 = vmatpush1.msra.mxu0 0.0
  %34 = vmatprep.subr.mxu0 0.0
  %35 = vmatpush1.msra.mxu0 0.0
  %36 = vmatprep.subr.mxu0 0.0
  %37 = vmatpush1.msra.mxu0 0.0
  %38 = vmatprep.subr.mxu0 0.0
  %39 = vmatpush1.msra.mxu0 0.0
  %40 = vmatprep.subr.mxu0 0.0
  %41 = vmatpush1.msra.mxu0 0.0
  %42 = vmatprep.subr.mxu0 0.0
  %43 = vmatpush1.msra.mxu0 0.0
  %44 = vmatprep.subr.mxu0 0.0
  %45 = vmatpush1.msra.mxu0 %v14
  %46 = vmatprep.subr.mxu0 0.0
  %47 = vmatpush1.msra.mxu0 %v13
  %48 = vmatprep.subr.mxu0 0.0
  %49 = vmatpush1.msra.mxu0 %v12
  %50 = vmatprep.subr.mxu0 0.0
  %51 = vmatpush1.msra.mxu0 %v11
  %52 = vmatprep.subr.mxu0 0.0
  %53 = vmatpush2.msra.mxu0 0.0
  %54 = vmatprep.subr.mxu0 0.0
  %55 = vmatpush2.msra.mxu0 0.0
  %56 = vmatprep.subr.mxu0 0.0
  %57 = vmatpush2.msra.mxu0 0.0
  %58 = vmatprep.subr.mxu0 0.0
  %59 = vmatpush2.msra.mxu0 0.0
  %60 = vmatprep.subr.mxu0 0.0
  %61 = vmatpush2.msra.mxu0 0.0
  %62 = vmatprep.subr.mxu0 0.0
  %63 = vmatpush2.msra.mxu0 0.0
  %64 = vmatprep.subr.mxu0 0.0
  %65 = vmatpush2.msra.mxu0 0.0
  %66 = vmatprep.subr.mxu0 0.0
  %67 = vmatpush2.msra.mxu0 0.0
  %68 = vmatprep.subr.mxu0 0.0
  %69 = vmatpush2.msra.mxu0 0.0
  %70 = vmatprep.subr.mxu0 0.0
  %71 = vmatpush2.msra.mxu0 0.0
  %72 = vmatprep.subr.mxu0 0.0
  %73 = vmatpush2.msra.mxu0 0.0
  %74 = vmatprep.subr.mxu0 0.0
  %75 = vmatpush2.msra.mxu0 0.0
  %76 = vmatprep.subr.mxu0 0.0
  %77 = vmatpush2.msra.mxu0 0.0
  %78 = vmatprep.subr.mxu0 0.0
  %79 = vmatpush2.msra.mxu0 0.0
  %80 = vmatprep.subr.mxu0 0.0
  %81 = vmatpush2.msra.mxu0 0.0
  %82 = vmatprep.subr.mxu0 0.0
  %83 = vmatpush2.msra.mxu0 0.0
  %84 = vmatprep.mubr.f32.mxu0 0.0
  %85 = vmatmul.mubr.f32.gmra.mxu0 %v18
  %v86 = vpop.f32.mrf.mxu0
  %v87 = vadd.f32 0.0, %v86
  %v88 = vpop.f32.mrf.mxu0
  %89 = vdwg.mxu0
  %v90 = vadd.f32 %v15, %v87
  %v91 = vxor.u32 %v90, 2147483648
  %v92 = vmul.f32 %v91, 1.442695
  %v93 = vpow.pop %v92
  %v94 = vadd.f32 %v93, 1.0
  %v95 = vrcp.pop %v94
  %v96 = vmul.f32 1.0, %v95
  %v97 = vtanh.pop %v90
  %v98 = vmul.f32 %v96, 0.0
  %100 = vrot.lane.b32.xlu0 %v97, 32
  %v101 = vpop.permute.xlu0 %100
  %v103 = vmul.f32 %v96, %v101
  %105 = vrot.lane.b32.xlu0 %v103, 32
  %v106 = vpop.permute.xlu0 %105
  %v108 = vadd.f32 %v98, %v106
  %v109 = vtanh.pop %v108
  %111 = vrot.lane.b32.xlu0 %v109, 32
  %v112 = vpop.permute.xlu0 %111
  %v114 = vmul.f32 %v96, %v112
  %v115 = vld [vmem:[%s0 + $0x48] sm:$0xff]
  %117 = vrot.lane.b32.xlu0 %v114, 64
  %v118 = vpop.permute.xlu0 %117
  %v120 = vmul.f32 %v115, %v118
  %v121 = vadd.f32 %v120, 0.0
  %v122 = vld [vmem:[%s0 + $0x8] sm:$0xff]
  %v123 = vsel %vm16, %v118, 0
  %125 = vmatprep.subr.mxu0 0.0
  %126 = vmatpush1.msra.mxu0 0.0
  %127 = vmatprep.subr.mxu0 0.0
  %128 = vmatpush1.msra.mxu0 0.0
  %129 = vmatprep.subr.mxu0 0.0
  %130 = vmatpush1.msra.mxu0 0.0
  %131 = vmatprep.subr.mxu0 0.0
  %132 = vmatpush1.msra.mxu0 0.0
  %133 = vmatprep.subr.mxu0 0.0
  %134 = vmatpush1.msra.mxu0 0.0
  %135 = vmatprep.subr.mxu0 0.0
  %136 = vmatpush1.msra.mxu0 0.0
  %137 = vmatprep.subr.mxu0 0.0
  %138 = vmatpush1.msra.mxu0 0.0
  %139 = vmatprep.subr.mxu0 0.0
  %140 = vmatpush1.msra.mxu0 0.0
  %141 = vmatprep.subr.mxu0 0.0
  %142 = vmatpush1.msra.mxu0 0.0
  %143 = vmatprep.subr.mxu0 0.0
  %144 = vmatpush1.msra.mxu0 0.0
  %145 = vmatprep.subr.mxu0 0.0
  %146 = vmatpush1.msra.mxu0 0.0
  %147 = vmatprep.subr.mxu0 0.0
  %148 = vmatpush1.msra.mxu0 0.0
  %149 = vmatprep.subr.mxu0 0.0
  %150 = vmatpush1.msra.mxu0 %v14
  %151 = vmatprep.subr.mxu0 0.0
  %152 = vmatpush1.msra.mxu0 %v13
  %153 = vmatprep.subr.mxu0 0.0
  %154 = vmatpush1.msra.mxu0 %v12
  %155 = vmatprep.subr.mxu0 0.0
  %156 = vmatpush1.msra.mxu0 %v11
  %157 = vmatprep.subr.mxu0 0.0
  %158 = vmatpush2.msra.mxu0 0.0
  %159 = vmatprep.subr.mxu0 0.0
  %160 = vmatpush2.msra.mxu0 0.0
  %161 = vmatprep.subr.mxu0 0.0
  %162 = vmatpush2.msra.mxu0 0.0
  %163 = vmatprep.subr.mxu0 0.0
  %164 = vmatpush2.msra.mxu0 0.0
  %165 = vmatprep.subr.mxu0 0.0
  %166 = vmatpush2.msra.mxu0 0.0
  %167 = vmatprep.subr.mxu0 0.0
  %168 = vmatpush2.msra.mxu0 0.0
  %169 = vmatprep.subr.mxu0 0.0
  %170 = vmatpush2.msra.mxu0 0.0
  %171 = vmatprep.subr.mxu0 0.0
  %172 = vmatpush2.msra.mxu0 0.0
  %173 = vmatprep.subr.mxu0 0.0
  %174 = vmatpush2.msra.mxu0 0.0
  %175 = vmatprep.subr.mxu0 0.0
  %176 = vmatpush2.msra.mxu0 0.0
  %177 = vmatprep.subr.mxu0 0.0
  %178 = vmatpush2.msra.mxu0 0.0
  %179 = vmatprep.subr.mxu0 0.0
  %180 = vmatpush2.msra.mxu0 0.0
  %181 = vmatprep.subr.mxu0 0.0
  %182 = vmatpush2.msra.mxu0 0.0
  %183 = vmatprep.subr.mxu0 0.0
  %184 = vmatpush2.msra.mxu0 0.0
  %185 = vmatprep.subr.mxu0 0.0
  %186 = vmatpush2.msra.mxu0 0.0
  %187 = vmatprep.subr.mxu0 0.0
  %188 = vmatpush2.msra.mxu0 0.0
  %189 = vmatprep.mubr.f32.mxu0 0.0
  %190 = vmatmul.mubr.f32.gmra.mxu0 %v123
  %v191 = vpop.f32.mrf.mxu0
  %v192 = vadd.f32 0.0, %v191
  %v193 = vpop.f32.mrf.mxu0
  %194 = vdwg.mxu0
  %v195 = vadd.f32 %v122, %v192
  %v196 = vxor.u32 %v195, 2147483648
  %v197 = vmul.f32 %v196, 1.442695
  %v198 = vpow.pop %v197
  %v199 = vadd.f32 %v198, 1.0
  %v200 = vrcp.pop %v199
  %v201 = vmul.f32 1.0, %v200
  %v202 = vtanh.pop %v195
  %v203 = vmul.f32 %v201, %v108
  %205 = vrot.lane.b32.xlu0 %v202, 32
  %v206 = vpop.permute.xlu0 %205
  %v208 = vmul.f32 %v201, %v206
  %210 = vrot.lane.b32.xlu0 %v208, 32
  %v211 = vpop.permute.xlu0 %210
  %v213 = vadd.f32 %v203, %v211
  %v214 = vtanh.pop %v213
  %216 = vrot.lane.b32.xlu0 %v214, 32
  %v217 = vpop.permute.xlu0 %216
  %v219 = vmul.f32 %v201, %v217
  %v220 = vld [vmem:[%s0 + $0x50] sm:$0xff]
  %222 = vrot.lane.b32.xlu0 %v219, 64
  %v223 = vpop.permute.xlu0 %222
  %v225 = vmul.f32 %v220, %v223
  %v226 = vadd.f32 %v121, %v225
  %v227 = vld [vmem:[%s0 + $0x10] sm:$0xff]
  %v228 = vsel %vm16, %v223, 0
  %230 = vmatprep.subr.mxu0 0.0
  %231 = vmatpush1.msra.mxu0 0.0
  %232 = vmatprep.subr.mxu0 0.0
  %233 = vmatpush1.msra.mxu0 0.0
  %234 = vmatprep.subr.mxu0 0.0
  %235 = vmatpush1.msra.mxu0 0.0
  %236 = vmatprep.subr.mxu0 0.0
  %237 = vmatpush1.msra.mxu0 0.0
  %238 = vmatprep.subr.mxu0 0.0
  %239 = vmatpush1.msra.mxu0 0.0
  %240 = vmatprep.subr.mxu0 0.0
  %241 = vmatpush1.msra.mxu0 0.0
  %242 = vmatprep.subr.mxu0 0.0
  %243 = vmatpush1.msra.mxu0 0.0
  %244 = vmatprep.subr.mxu0 0.0
  %245 = vmatpush1.msra.mxu0 0.0
  %246 = vmatprep.subr.mxu0 0.0
  %247 = vmatpush1.msra.mxu0 0.0
  %248 = vmatprep.subr.mxu0 0.0
  %249 = vmatpush1.msra.mxu0 0.0
  %250 = vmatprep.subr.mxu0 0.0
  %251 = vmatpush1.msra.mxu0 0.0
  %252 = vmatprep.subr.mxu0 0.0
  %253 = vmatpush1.msra.mxu0 0.0
  %254 = vmatprep.subr.mxu0 0.0
  %255 = vmatpush1.msra.mxu0 %v14
  %256 = vmatprep.subr.mxu0 0.0
  %257 = vmatpush1.msra.mxu0 %v13
  %258 = vmatprep.subr.mxu0 0.0
  %259 = vmatpush1.msra.mxu0 %v12
  %260 = vmatprep.subr.mxu0 0.0
  %261 = vmatpush1.msra.mxu0 %v11
  %262 = vmatprep.subr.mxu0 0.0
  %263 = vmatpush2.msra.mxu0 0.0
  %264 = vmatprep.subr.mxu0 0.0
  %265 = vmatpush2.msra.mxu0 0.0
  %266 = vmatprep.subr.mxu0 0.0
  %267 = vmatpush2.msra.mxu0 0.0
  %268 = vmatprep.subr.mxu0 0.0
  %269 = vmatpush2.msra.mxu0 0.0
  %270 = vmatprep.subr.mxu0 0.0
  %271 = vmatpush2.msra.mxu0 0.0
  %272 = vmatprep.subr.mxu0 0.0
  %273 = vmatpush2.msra.mxu0 0.0
  %274 = vmatprep.subr.mxu0 0.0
  %275 = vmatpush2.msra.mxu0 0.0
  %276 = vmatprep.subr.mxu0 0.0
  %277 = vmatpush2.msra.mxu0 0.0
  %278 = vmatprep.subr.mxu0 0.0
  %279 = vmatpush2.msra.mxu0 0.0
  %280 = vmatprep.subr.mxu0 0.0
  %281 = vmatpush2.msra.mxu0 0.0
  %282 = vmatprep.subr.mxu0 0.0
  %283 = vmatpush2.msra.mxu0 0.0
  %284 = vmatprep.subr.mxu0 0.0
  %285 = vmatpush2.msra.mxu0 0.0
  %286 = vmatprep.subr.mxu0 0.0
  %287 = vmatpush2.msra.mxu0 0.0
  %288 = vmatprep.subr.mxu0 0.0
  %289 = vmatpush2.msra.mxu0 0.0
  %290 = vmatprep.subr.mxu0 0.0
  %291 = vmatpush2.msra.mxu0 0.0
  %292 = vmatprep.subr.mxu0 0.0
  %293 = vmatpush2.msra.mxu0 0.0
  %294 = vmatprep.mubr.f32.mxu0 0.0
  %295 = vmatmul.mubr.f32.gmra.mxu0 %v228
  %v296 = vpop.f32.mrf.mxu0
  %v297 = vadd.f32 0.0, %v296
  %v298 = vpop.f32.mrf.mxu0
  %299 = vdwg.mxu0
  %v300 = vadd.f32 %v227, %v297
  %v301 = vxor.u32 %v300, 2147483648
  %v302 = vmul.f32 %v301, 1.442695
  %v303 = vpow.pop %v302
  %v304 = vadd.f32 %v303, 1.0
  %v305 = vrcp.pop %v304
  %v306 = vmul.f32 1.0, %v305
  %v307 = vtanh.pop %v300
  %v308 = vmul.f32 %v306, %v213
  %310 = vrot.lane.b32.xlu0 %v307, 32
  %v311 = vpop.permute.xlu0 %310
  %v313 = vmul.f32 %v306, %v311
  %315 = vrot.lane.b32.xlu0 %v313, 32
  %v316 = vpop.permute.xlu0 %315
  %v318 = vadd.f32 %v308, %v316
  %v319 = vtanh.pop %v318
  %321 = vrot.lane.b32.xlu0 %v319, 32
  %v322 = vpop.permute.xlu0 %321
  %v324 = vmul.f32 %v306, %v322
  %v325 = vld [vmem:[%s0 + $0x58] sm:$0xff]
  %327 = vrot.lane.b32.xlu0 %v324, 64
  %v328 = vpop.permute.xlu0 %327
  %v330 = vmul.f32 %v325, %v328
  %v331 = vadd.f32 %v226, %v330
  %v332 = vld [vmem:[%s0 + $0x18] sm:$0xff]
  %v333 = vsel %vm16, %v328, 0
  %335 = vmatprep.subr.mxu0 0.0
  %336 = vmatpush1.msra.mxu0 0.0
  %337 = vmatprep.subr.mxu0 0.0
  %338 = vmatpush1.msra.mxu0 0.0
  %339 = vmatprep.subr.mxu0 0.0
  %340 = vmatpush1.msra.mxu0 0.0
  %341 = vmatprep.subr.mxu0 0.0
  %342 = vmatpush1.msra.mxu0 0.0
  %343 = vmatprep.subr.mxu0 0.0
  %344 = vmatpush1.msra.mxu0 0.0
  %345 = vmatprep.subr.mxu0 0.0
  %346 = vmatpush1.msra.mxu0 0.0
  %347 = vmatprep.subr.mxu0 0.0
  %348 = vmatpush1.msra.mxu0 0.0
  %349 = vmatprep.subr.mxu0 0.0
  %350 = vmatpush1.msra.mxu0 0.0
  %351 = vmatprep.subr.mxu0 0.0
  %352 = vmatpush1.msra.mxu0 0.0
  %353 = vmatprep.subr.mxu0 0.0
  %354 = vmatpush1.msra.mxu0 0.0
  %355 = vmatprep.subr.mxu0 0.0
  %356 = vmatpush1.msra.mxu0 0.0
  %357 = vmatprep.subr.mxu0 0.0
  %358 = vmatpush1.msra.mxu0 0.0
  %359 = vmatprep.subr.mxu0 0.0
  %360 = vmatpush1.msra.mxu0 %v14
  %361 = vmatprep.subr.mxu0 0.0
  %362 = vmatpush1.msra.mxu0 %v13
  %363 = vmatprep.subr.mxu0 0.0
  %364 = vmatpush1.msra.mxu0 %v12
  %365 = vmatprep.subr.mxu0 0.0
  %366 = vmatpush1.msra.mxu0 %v11
  %367 = vmatprep.subr.mxu0 0.0
  %368 = vmatpush2.msra.mxu0 0.0
  %369 = vmatprep.subr.mxu0 0.0
  %370 = vmatpush2.msra.mxu0 0.0
  %371 = vmatprep.subr.mxu0 0.0
  %372 = vmatpush2.msra.mxu0 0.0
  %373 = vmatprep.subr.mxu0 0.0
  %374 = vmatpush2.msra.mxu0 0.0
  %375 = vmatprep.subr.mxu0 0.0
  %376 = vmatpush2.msra.mxu0 0.0
  %377 = vmatprep.subr.mxu0 0.0
  %378 = vmatpush2.msra.mxu0 0.0
  %379 = vmatprep.subr.mxu0 0.0
  %380 = vmatpush2.msra.mxu0 0.0
  %381 = vmatprep.subr.mxu0 0.0
  %382 = vmatpush2.msra.mxu0 0.0
  %383 = vmatprep.subr.mxu0 0.0
  %384 = vmatpush2.msra.mxu0 0.0
  %385 = vmatprep.subr.mxu0 0.0
  %386 = vmatpush2.msra.mxu0 0.0
  %387 = vmatprep.subr.mxu0 0.0
  %388 = vmatpush2.msra.mxu0 0.0
  %389 = vmatprep.subr.mxu0 0.0
  %390 = vmatpush2.msra.mxu0 0.0
  %391 = vmatprep.subr.mxu0 0.0
  %392 = vmatpush2.msra.mxu0 0.0
  %393 = vmatprep.subr.mxu0 0.0
  %394 = vmatpush2.msra.mxu0 0.0
  %395 = vmatprep.subr.mxu0 0.0
  %396 = vmatpush2.msra.mxu0 0.0
  %397 = vmatprep.subr.mxu0 0.0
  %398 = vmatpush2.msra.mxu0 0.0
  %399 = vmatprep.mubr.f32.mxu0 0.0
  %400 = vmatmul.mubr.f32.gmra.mxu0 %v333
  %v401 = vpop.f32.mrf.mxu0
  %v402 = vadd.f32 0.0, %v401
  %v403 = vpop.f32.mrf.mxu0
  %404 = vdwg.mxu0
  %v405 = vadd.f32 %v332, %v402
  %v406 = vxor.u32 %v405, 2147483648
  %v407 = vmul.f32 %v406, 1.442695
  %v408 = vpow.pop %v407
  %v409 = vadd.f32 %v408, 1.0
  %v410 = vrcp.pop %v409
  %v411 = vmul.f32 1.0, %v410
  %v412 = vtanh.pop %v405
  %v413 = vmul.f32 %v411, %v318
  %415 = vrot.lane.b32.xlu0 %v412, 32
  %v416 = vpop.permute.xlu0 %415
  %v418 = vmul.f32 %v411, %v416
  %420 = vrot.lane.b32.xlu0 %v418, 32
  %v421 = vpop.permute.xlu0 %420
  %v423 = vadd.f32 %v413, %v421
  %v424 = vtanh.pop %v423
  %426 = vrot.lane.b32.xlu0 %v424, 32
  %v427 = vpop.permute.xlu0 %426
  %v429 = vmul.f32 %v411, %v427
  %v430 = vld [vmem:[%s0 + $0x60] sm:$0xff]
  %432 = vrot.lane.b32.xlu0 %v429, 64
  %v433 = vpop.permute.xlu0 %432
  %v435 = vmul.f32 %v430, %v433
  %v436 = vadd.f32 %v331, %v435
  %v437 = vld [vmem:[%s0 + $0x20] sm:$0xff]
  %v438 = vsel %vm16, %v433, 0
  %440 = vmatprep.subr.mxu0 0.0
  %441 = vmatpush1.msra.mxu0 0.0
  %442 = vmatprep.subr.mxu0 0.0
  %443 = vmatpush1.msra.mxu0 0.0
  %444 = vmatprep.subr.mxu0 0.0
  %445 = vmatpush1.msra.mxu0 0.0
  %446 = vmatprep.subr.mxu0 0.0
  %447 = vmatpush1.msra.mxu0 0.0
  %448 = vmatprep.subr.mxu0 0.0
  %449 = vmatpush1.msra.mxu0 0.0
  %450 = vmatprep.subr.mxu0 0.0
  %451 = vmatpush1.msra.mxu0 0.0
  %452 = vmatprep.subr.mxu0 0.0
  %453 = vmatpush1.msra.mxu0 0.0
  %454 = vmatprep.subr.mxu0 0.0
  %455 = vmatpush1.msra.mxu0 0.0
  %456 = vmatprep.subr.mxu0 0.0
  %457 = vmatpush1.msra.mxu0 0.0
  %458 = vmatprep.subr.mxu0 0.0
  %459 = vmatpush1.msra.mxu0 0.0
  %460 = vmatprep.subr.mxu0 0.0
  %461 = vmatpush1.msra.mxu0 0.0
  %462 = vmatprep.subr.mxu0 0.0
  %463 = vmatpush1.msra.mxu0 0.0
  %464 = vmatprep.subr.mxu0 0.0
  %465 = vmatpush1.msra.mxu0 %v14
  %466 = vmatprep.subr.mxu0 0.0
  %467 = vmatpush1.msra.mxu0 %v13
  %468 = vmatprep.subr.mxu0 0.0
  %469 = vmatpush1.msra.mxu0 %v12
  %470 = vmatprep.subr.mxu0 0.0
  %471 = vmatpush1.msra.mxu0 %v11
  %472 = vmatprep.subr.mxu0 0.0
  %473 = vmatpush2.msra.mxu0 0.0
  %474 = vmatprep.subr.mxu0 0.0
  %475 = vmatpush2.msra.mxu0 0.0
  %476 = vmatprep.subr.mxu0 0.0
  %477 = vmatpush2.msra.mxu0 0.0
  %478 = vmatprep.subr.mxu0 0.0
  %479 = vmatpush2.msra.mxu0 0.0
  %480 = vmatprep.subr.mxu0 0.0
  %481 = vmatpush2.msra.mxu0 0.0
  %482 = vmatprep.subr.mxu0 0.0
  %483 = vmatpush2.msra.mxu0 0.0
  %484 = vmatprep.subr.mxu0 0.0
  %485 = vmatpush2.msra.mxu0 0.0
  %486 = vmatprep.subr.mxu0 0.0
  %487 = vmatpush2.msra.mxu0 0.0
  %488 = vmatprep.subr.mxu0 0.0
  %489 = vmatpush2.msra.mxu0 0.0
  %490 = vmatprep.subr.mxu0 0.0
  %491 = vmatpush2.msra.mxu0 0.0
  %492 = vmatprep.subr.mxu0 0.0
  %493 = vmatpush2.msra.mxu0 0.0
  %494 = vmatprep.subr.mxu0 0.0
  %495 = vmatpush2.msra.mxu0 0.0
  %496 = vmatprep.subr.mxu0 0.0
  %497 = vmatpush2.msra.mxu0 0.0
  %498 = vmatprep.subr.mxu0 0.0
  %499 = vmatpush2.msra.mxu0 0.0
  %500 = vmatprep.subr.mxu0 0.0
  %501 = vmatpush2.msra.mxu0 0.0
  %502 = vmatprep.subr.mxu0 0.0
  %503 = vmatpush2.msra.mxu0 0.0
  %504 = vmatprep.mubr.f32.mxu0 0.0
  %505 = vmatmul.mubr.f32.gmra.mxu0 %v438
  %v506 = vpop.f32.mrf.mxu0
  %v507 = vadd.f32 0.0, %v506
  %v508 = vpop.f32.mrf.mxu0
  %509 = vdwg.mxu0
  %v510 = vadd.f32 %v437, %v507
  %v511 = vxor.u32 %v510, 2147483648
  %v512 = vmul.f32 %v511, 1.442695
  %v513 = vpow.pop %v512
  %v514 = vadd.f32 %v513, 1.0
  %v515 = vrcp.pop %v514
  %v516 = vmul.f32 1.0, %v515
  %v517 = vtanh.pop %v510
  %v518 = vmul.f32 %v516, %v423
  %520 = vrot.lane.b32.xlu0 %v517, 32
  %v521 = vpop.permute.xlu0 %520
  %v523 = vmul.f32 %v516, %v521
  %525 = vrot.lane.b32.xlu0 %v523, 32
  %v526 = vpop.permute.xlu0 %525
  %v528 = vadd.f32 %v518, %v526
  %v529 = vtanh.pop %v528
  %531 = vrot.lane.b32.xlu0 %v529, 32
  %v532 = vpop.permute.xlu0 %531
  %v534 = vmul.f32 %v516, %v532
  %v535 = vld [vmem:[%s0 + $0x68] sm:$0xff]
  %537 = vrot.lane.b32.xlu0 %v534, 64
  %v538 = vpop.permute.xlu0 %537
  %v540 = vmul.f32 %v535, %v538
  %v541 = vadd.f32 %v436, %v540
  %v542 = vld [vmem:[%s0 + $0x28] sm:$0xff]
  %v543 = vsel %vm16, %v538, 0
  %545 = vmatprep.subr.mxu0 0.0
  %546 = vmatpush1.msra.mxu0 0.0
  %547 = vmatprep.subr.mxu0 0.0
  %548 = vmatpush1.msra.mxu0 0.0
  %549 = vmatprep.subr.mxu0 0.0
  %550 = vmatpush1.msra.mxu0 0.0
  %551 = vmatprep.subr.mxu0 0.0
  %552 = vmatpush1.msra.mxu0 0.0
  %553 = vmatprep.subr.mxu0 0.0
  %554 = vmatpush1.msra.mxu0 0.0
  %555 = vmatprep.subr.mxu0 0.0
  %556 = vmatpush1.msra.mxu0 0.0
  %557 = vmatprep.subr.mxu0 0.0
  %558 = vmatpush1.msra.mxu0 0.0
  %559 = vmatprep.subr.mxu0 0.0
  %560 = vmatpush1.msra.mxu0 0.0
  %561 = vmatprep.subr.mxu0 0.0
  %562 = vmatpush1.msra.mxu0 0.0
  %563 = vmatprep.subr.mxu0 0.0
  %564 = vmatpush1.msra.mxu0 0.0
  %565 = vmatprep.subr.mxu0 0.0
  %566 = vmatpush1.msra.mxu0 0.0
  %567 = vmatprep.subr.mxu0 0.0
  %568 = vmatpush1.msra.mxu0 0.0
  %569 = vmatprep.subr.mxu0 0.0
  %570 = vmatpush1.msra.mxu0 %v14
  %571 = vmatprep.subr.mxu0 0.0
  %572 = vmatpush1.msra.mxu0 %v13
  %573 = vmatprep.subr.mxu0 0.0
  %574 = vmatpush1.msra.mxu0 %v12
  %575 = vmatprep.subr.mxu0 0.0
  %576 = vmatpush1.msra.mxu0 %v11
  %577 = vmatprep.subr.mxu0 0.0
  %578 = vmatpush2.msra.mxu0 0.0
  %579 = vmatprep.subr.mxu0 0.0
  %580 = vmatpush2.msra.mxu0 0.0
  %581 = vmatprep.subr.mxu0 0.0
  %582 = vmatpush2.msra.mxu0 0.0
  %583 = vmatprep.subr.mxu0 0.0
  %584 = vmatpush2.msra.mxu0 0.0
  %585 = vmatprep.subr.mxu0 0.0
  %586 = vmatpush2.msra.mxu0 0.0
  %587 = vmatprep.subr.mxu0 0.0
  %588 = vmatpush2.msra.mxu0 0.0
  %589 = vmatprep.subr.mxu0 0.0
  %590 = vmatpush2.msra.mxu0 0.0
  %591 = vmatprep.subr.mxu0 0.0
  %592 = vmatpush2.msra.mxu0 0.0
  %593 = vmatprep.subr.mxu0 0.0
  %594 = vmatpush2.msra.mxu0 0.0
  %595 = vmatprep.subr.mxu0 0.0
  %596 = vmatpush2.msra.mxu0 0.0
  %597 = vmatprep.subr.mxu0 0.0
  %598 = vmatpush2.msra.mxu0 0.0
  %599 = vmatprep.subr.mxu0 0.0
  %600 = vmatpush2.msra.mxu0 0.0
  %601 = vmatprep.subr.mxu0 0.0
  %602 = vmatpush2.msra.mxu0 0.0
  %603 = vmatprep.subr.mxu0 0.0
  %604 = vmatpush2.msra.mxu0 0.0
  %605 = vmatprep.subr.mxu0 0.0
  %606 = vmatpush2.msra.mxu0 0.0
  %607 = vmatprep.subr.mxu0 0.0
  %608 = vmatpush2.msra.mxu0 0.0
  %609 = vmatprep.mubr.f32.mxu0 0.0
  %610 = vmatmul.mubr.f32.gmra.mxu0 %v543
  %v611 = vpop.f32.mrf.mxu0
  %v612 = vadd.f32 0.0, %v611
  %v613 = vpop.f32.mrf.mxu0
  %614 = vdwg.mxu0
  %v615 = vadd.f32 %v542, %v612
  %v616 = vxor.u32 %v615, 2147483648
  %v617 = vmul.f32 %v616, 1.442695
  %v618 = vpow.pop %v617
  %v619 = vadd.f32 %v618, 1.0
  %v620 = vrcp.pop %v619
  %v621 = vmul.f32 1.0, %v620
  %v622 = vtanh.pop %v615
  %v623 = vmul.f32 %v621, %v528
  %625 = vrot.lane.b32.xlu0 %v622, 32
  %v626 = vpop.permute.xlu0 %625
  %v628 = vmul.f32 %v621, %v626
  %630 = vrot.lane.b32.xlu0 %v628, 32
  %v631 = vpop.permute.xlu0 %630
  %v633 = vadd.f32 %v623, %v631
  %v634 = vtanh.pop %v633
  %636 = vrot.lane.b32.xlu0 %v634, 32
  %v637 = vpop.permute.xlu0 %636
  %v639 = vmul.f32 %v621, %v637
  %v640 = vld [vmem:[%s0 + $0x70] sm:$0xff]
  %642 = vrot.lane.b32.xlu0 %v639, 64
  %v643 = vpop.permute.xlu0 %642
  %v645 = vmul.f32 %v640, %v643
  %v646 = vadd.f32 %v541, %v645
  %v647 = vld [vmem:[%s0 + $0x30] sm:$0xff]
  %v648 = vsel %vm16, %v643, 0
  %650 = vmatprep.subr.mxu0 0.0
  %651 = vmatpush1.msra.mxu0 0.0
  %652 = vmatprep.subr.mxu0 0.0
  %653 = vmatpush1.msra.mxu0 0.0
  %654 = vmatprep.subr.mxu0 0.0
  %655 = vmatpush1.msra.mxu0 0.0
  %656 = vmatprep.subr.mxu0 0.0
  %657 = vmatpush1.msra.mxu0 0.0
  %658 = vmatprep.subr.mxu0 0.0
  %659 = vmatpush1.msra.mxu0 0.0
  %660 = vmatprep.subr.mxu0 0.0
  %661 = vmatpush1.msra.mxu0 0.0
  %662 = vmatprep.subr.mxu0 0.0
  %663 = vmatpush1.msra.mxu0 0.0
  %664 = vmatprep.subr.mxu0 0.0
  %665 = vmatpush1.msra.mxu0 0.0
  %666 = vmatprep.subr.mxu0 0.0
  %667 = vmatpush1.msra.mxu0 0.0
  %668 = vmatprep.subr.mxu0 0.0
  %669 = vmatpush1.msra.mxu0 0.0
  %670 = vmatprep.subr.mxu0 0.0
  %671 = vmatpush1.msra.mxu0 0.0
  %672 = vmatprep.subr.mxu0 0.0
  %673 = vmatpush1.msra.mxu0 0.0
  %674 = vmatprep.subr.mxu0 0.0
  %675 = vmatpush1.msra.mxu0 %v14
  %676 = vmatprep.subr.mxu0 0.0
  %677 = vmatpush1.msra.mxu0 %v13
  %678 = vmatprep.subr.mxu0 0.0
  %679 = vmatpush1.msra.mxu0 %v12
  %680 = vmatprep.subr.mxu0 0.0
  %681 = vmatpush1.msra.mxu0 %v11
  %682 = vmatprep.subr.mxu0 0.0
  %683 = vmatpush2.msra.mxu0 0.0
  %684 = vmatprep.subr.mxu0 0.0
  %685 = vmatpush2.msra.mxu0 0.0
  %686 = vmatprep.subr.mxu0 0.0
  %687 = vmatpush2.msra.mxu0 0.0
  %688 = vmatprep.subr.mxu0 0.0
  %689 = vmatpush2.msra.mxu0 0.0
  %690 = vmatprep.subr.mxu0 0.0
  %691 = vmatpush2.msra.mxu0 0.0
  %692 = vmatprep.subr.mxu0 0.0
  %693 = vmatpush2.msra.mxu0 0.0
  %694 = vmatprep.subr.mxu0 0.0
  %695 = vmatpush2.msra.mxu0 0.0
  %696 = vmatprep.subr.mxu0 0.0
  %697 = vmatpush2.msra.mxu0 0.0
  %698 = vmatprep.subr.mxu0 0.0
  %699 = vmatpush2.msra.mxu0 0.0
  %700 = vmatprep.subr.mxu0 0.0
  %701 = vmatpush2.msra.mxu0 0.0
  %702 = vmatprep.subr.mxu0 0.0
  %703 = vmatpush2.msra.mxu0 0.0
  %704 = vmatprep.subr.mxu0 0.0
  %705 = vmatpush2.msra.mxu0 0.0
  %706 = vmatprep.subr.mxu0 0.0
  %707 = vmatpush2.msra.mxu0 0.0
  %708 = vmatprep.subr.mxu0 0.0
  %709 = vmatpush2.msra.mxu0 0.0
  %710 = vmatprep.subr.mxu0 0.0
  %711 = vmatpush2.msra.mxu0 0.0
  %712 = vmatprep.subr.mxu0 0.0
  %713 = vmatpush2.msra.mxu0 0.0
  %714 = vmatprep.mubr.f32.mxu0 0.0
  %715 = vmatmul.mubr.f32.gmra.mxu0 %v648
  %v716 = vpop.f32.mrf.mxu0
  %v717 = vadd.f32 0.0, %v716
  %v718 = vpop.f32.mrf.mxu0
  %719 = vdwg.mxu0
  %v720 = vadd.f32 %v647, %v717
  %v721 = vxor.u32 %v720, 2147483648
  %v722 = vmul.f32 %v721, 1.442695
  %v723 = vpow.pop %v722
  %v724 = vadd.f32 %v723, 1.0
  %v725 = vrcp.pop %v724
  %v726 = vmul.f32 1.0, %v725
  %v727 = vtanh.pop %v720
  %v728 = vmul.f32 %v726, %v633
  %730 = vrot.lane.b32.xlu0 %v727, 32
  %v731 = vpop.permute.xlu0 %730
  %v733 = vmul.f32 %v726, %v731
  %735 = vrot.lane.b32.xlu0 %v733, 32
  %v736 = vpop.permute.xlu0 %735
  %v738 = vadd.f32 %v728, %v736
  %v739 = vtanh.pop %v738
  %741 = vrot.lane.b32.xlu0 %v739, 32
  %v742 = vpop.permute.xlu0 %741
  %v744 = vmul.f32 %v726, %v742
  %v745 = vld [vmem:[%s0 + $0x78] sm:$0xff]
  %747 = vrot.lane.b32.xlu0 %v744, 64
  %v748 = vpop.permute.xlu0 %747
  %v750 = vmul.f32 %v745, %v748
  %v751 = vadd.f32 %v646, %v750
  %v752 = vld [vmem:[%s0 + $0x38] sm:$0xff]
  %v753 = vsel %vm16, %v748, 0
  %755 = vmatprep.subr.mxu0 0.0
  %756 = vmatpush1.msra.mxu0 0.0
  %757 = vmatprep.subr.mxu0 0.0
  %758 = vmatpush1.msra.mxu0 0.0
  %759 = vmatprep.subr.mxu0 0.0
  %760 = vmatpush1.msra.mxu0 0.0
  %761 = vmatprep.subr.mxu0 0.0
  %762 = vmatpush1.msra.mxu0 0.0
  %763 = vmatprep.subr.mxu0 0.0
  %764 = vmatpush1.msra.mxu0 0.0
  %765 = vmatprep.subr.mxu0 0.0
  %766 = vmatpush1.msra.mxu0 0.0
  %767 = vmatprep.subr.mxu0 0.0
  %768 = vmatpush1.msra.mxu0 0.0
  %769 = vmatprep.subr.mxu0 0.0
  %770 = vmatpush1.msra.mxu0 0.0
  %771 = vmatprep.subr.mxu0 0.0
  %772 = vmatpush1.msra.mxu0 0.0
  %773 = vmatprep.subr.mxu0 0.0
  %774 = vmatpush1.msra.mxu0 0.0
  %775 = vmatprep.subr.mxu0 0.0
  %776 = vmatpush1.msra.mxu0 0.0
  %777 = vmatprep.subr.mxu0 0.0
  %778 = vmatpush1.msra.mxu0 0.0
  %779 = vmatprep.subr.mxu0 0.0
  %780 = vmatpush1.msra.mxu0 %v14
  %781 = vmatprep.subr.mxu0 0.0
  %782 = vmatpush1.msra.mxu0 %v13
  %783 = vmatprep.subr.mxu0 0.0
  %784 = vmatpush1.msra.mxu0 %v12
  %785 = vmatprep.subr.mxu0 0.0
  %786 = vmatpush1.msra.mxu0 %v11
  %787 = vmatprep.subr.mxu0 0.0
  %788 = vmatpush2.msra.mxu0 0.0
  %789 = vmatprep.subr.mxu0 0.0
  %790 = vmatpush2.msra.mxu0 0.0
  %791 = vmatprep.subr.mxu0 0.0
  %792 = vmatpush2.msra.mxu0 0.0
  %793 = vmatprep.subr.mxu0 0.0
  %794 = vmatpush2.msra.mxu0 0.0
  %795 = vmatprep.subr.mxu0 0.0
  %796 = vmatpush2.msra.mxu0 0.0
  %797 = vmatprep.subr.mxu0 0.0
  %798 = vmatpush2.msra.mxu0 0.0
  %799 = vmatprep.subr.mxu0 0.0
  %800 = vmatpush2.msra.mxu0 0.0
  %801 = vmatprep.subr.mxu0 0.0
  %802 = vmatpush2.msra.mxu0 0.0
  %803 = vmatprep.subr.mxu0 0.0
  %804 = vmatpush2.msra.mxu0 0.0
  %805 = vmatprep.subr.mxu0 0.0
  %806 = vmatpush2.msra.mxu0 0.0
  %807 = vmatprep.subr.mxu0 0.0
  %808 = vmatpush2.msra.mxu0 0.0
  %809 = vmatprep.subr.mxu0 0.0
  %810 = vmatpush2.msra.mxu0 0.0
  %811 = vmatprep.subr.mxu0 0.0
  %812 = vmatpush2.msra.mxu0 0.0
  %813 = vmatprep.subr.mxu0 0.0
  %814 = vmatpush2.msra.mxu0 0.0
  %815 = vmatprep.subr.mxu0 0.0
  %816 = vmatpush2.msra.mxu0 0.0
  %817 = vmatprep.subr.mxu0 0.0
  %818 = vmatpush2.msra.mxu0 0.0
  %819 = vmatprep.mubr.f32.mxu0 0.0
  %820 = vmatmul.mubr.f32.gmra.mxu0 %v753
  %v821 = vpop.f32.mrf.mxu0
  %v822 = vadd.f32 0.0, %v821
  %v823 = vpop.f32.mrf.mxu0
  %824 = vdwg.mxu0
  %v825 = vadd.f32 %v752, %v822
  %v826 = vxor.u32 %v825, 2147483648
  %v827 = vmul.f32 %v826, 1.442695
  %v828 = vpow.pop %v827
  %v829 = vadd.f32 %v828, 1.0
  %v830 = vrcp.pop %v829
  %v831 = vmul.f32 1.0, %v830
  %v832 = vtanh.pop %v825
  %v833 = vmul.f32 %v831, %v738
  %835 = vrot.lane.b32.xlu0 %v832, 32
  %v836 = vpop.permute.xlu0 %835
  %v838 = vmul.f32 %v831, %v836
  %840 = vrot.lane.b32.xlu0 %v838, 32
  %v841 = vpop.permute.xlu0 %840
  %v843 = vadd.f32 %v833, %v841
  %v844 = vtanh.pop %v843
  %846 = vrot.lane.b32.xlu0 %v844, 32
  %v847 = vpop.permute.xlu0 %846
  %v849 = vmul.f32 %v831, %v847
  %v850 = vld [vmem:[%s0 + $0x80] sm:$0xff]
  %852 = vrot.lane.b32.xlu0 %v849, 64
  %v853 = vpop.permute.xlu0 %852
  %v855 = vmul.f32 %v850, %v853
  %v856 = vadd.f32 %v751, %v855
  %v857 = vsel %vm16, %v856, 0.0
  %858 = vadd.xlane.f32.xlu0 %v857
  %v859 = vpop.xlane.xlu0 %858
  %v860 = vrcp.pop 32.0
  %v861 = vmul.f32 %v859, %v860
  %v862 = vsub.f32 %v856, %v861
  %v863 = vmul.f32 %v862, %v862
  %v864 = vsel %vm16, %v863, 0.0
  %865 = vadd.xlane.f32.xlu0 %v864
  %v866 = vpop.xlane.xlu0 %865
  %v867 = vmul.f32 %v866, %v860
  %v868 = vadd.f32 %v867, 1e-06
  %v869 = vrsqrt.pop %v868
  %v870 = vmul.f32 %v862, %v869
  %v871 = vld [vmem:[%s1 + $0x20] sm:$0xff]
  %v872 = vld [vmem:[%s1 + $0x28] sm:$0xff]
  %v873 = vld [vmem:[%s1 + $0x30] sm:$0xff]
  %v874 = vld [vmem:[%s1 + $0x38] sm:$0xff]
  %v875 = vld [vmem:[%s1 + $0xa0] sm:$0x1]
  %v876 = vlaneseq
  %v877 = vshrl.u32 %v876, 7
  %v878 = vsub.s32 0, %v877
  %v879 = vrot.slane %v875, %v878
  %v881 = vsel %vm16, %v870, 0
  %883 = vmatprep.subr.mxu0 0.0
  %884 = vmatpush1.msra.mxu0 0.0
  %885 = vmatprep.subr.mxu0 0.0
  %886 = vmatpush1.msra.mxu0 0.0
  %887 = vmatprep.subr.mxu0 0.0
  %888 = vmatpush1.msra.mxu0 0.0
  %889 = vmatprep.subr.mxu0 0.0
  %890 = vmatpush1.msra.mxu0 0.0
  %891 = vmatprep.subr.mxu0 0.0
  %892 = vmatpush1.msra.mxu0 0.0
  %893 = vmatprep.subr.mxu0 0.0
  %894 = vmatpush1.msra.mxu0 0.0
  %895 = vmatprep.subr.mxu0 0.0
  %896 = vmatpush1.msra.mxu0 0.0
  %897 = vmatprep.subr.mxu0 0.0
  %898 = vmatpush1.msra.mxu0 0.0
  %899 = vmatprep.subr.mxu0 0.0
  %900 = vmatpush1.msra.mxu0 0.0
  %901 = vmatprep.subr.mxu0 0.0
  %902 = vmatpush1.msra.mxu0 0.0
  %903 = vmatprep.subr.mxu0 0.0
  %904 = vmatpush1.msra.mxu0 0.0
  %905 = vmatprep.subr.mxu0 0.0
  %906 = vmatpush1.msra.mxu0 0.0
  %907 = vmatprep.subr.mxu0 0.0
  %908 = vmatpush1.msra.mxu0 %v874
  %909 = vmatprep.subr.mxu0 0.0
  %910 = vmatpush1.msra.mxu0 %v873
  %911 = vmatprep.subr.mxu0 0.0
  %912 = vmatpush1.msra.mxu0 %v872
  %913 = vmatprep.subr.mxu0 0.0
  %914 = vmatpush1.msra.mxu0 %v871
  %915 = vmatprep.subr.mxu0 0.0
  %916 = vmatpush2.msra.mxu0 0.0
  %917 = vmatprep.subr.mxu0 0.0
  %918 = vmatpush2.msra.mxu0 0.0
  %919 = vmatprep.subr.mxu0 0.0
  %920 = vmatpush2.msra.mxu0 0.0
  %921 = vmatprep.subr.mxu0 0.0
  %922 = vmatpush2.msra.mxu0 0.0
  %923 = vmatprep.subr.mxu0 0.0
  %924 = vmatpush2.msra.mxu0 0.0
  %925 = vmatprep.subr.mxu0 0.0
  %926 = vmatpush2.msra.mxu0 0.0
  %927 = vmatprep.subr.mxu0 0.0
  %928 = vmatpush2.msra.mxu0 0.0
  %929 = vmatprep.subr.mxu0 0.0
  %930 = vmatpush2.msra.mxu0 0.0
  %931 = vmatprep.subr.mxu0 0.0
  %932 = vmatpush2.msra.mxu0 0.0
  %933 = vmatprep.subr.mxu0 0.0
  %934 = vmatpush2.msra.mxu0 0.0
  %935 = vmatprep.subr.mxu0 0.0
  %936 = vmatpush2.msra.mxu0 0.0
  %937 = vmatprep.subr.mxu0 0.0
  %938 = vmatpush2.msra.mxu0 0.0
  %939 = vmatprep.subr.mxu0 0.0
  %940 = vmatpush2.msra.mxu0 0.0
  %941 = vmatprep.subr.mxu0 0.0
  %942 = vmatpush2.msra.mxu0 0.0
  %943 = vmatprep.subr.mxu0 0.0
  %944 = vmatpush2.msra.mxu0 0.0
  %945 = vmatprep.subr.mxu0 0.0
  %946 = vmatpush2.msra.mxu0 0.0
  %947 = vmatprep.mubr.f32.mxu0 0.0
  %948 = vmatmul.mubr.f32.gmra.mxu0 %v881
  %v949 = vpop.f32.mrf.mxu0
  %v950 = vadd.f32 %v879, %v949
  %v951 = vpop.f32.mrf.mxu0
  %952 = vdwg.mxu0
  %954 = vrot.lane.b32.xlu0 %v950, 96
  %v955 = vpop.permute.xlu0 %954
  %v956 = vsel %vm16, %v950, 0
  %v958 = vsel %vm16, %v955, 0
  %960 = vmatprep.subr.mxu0 0.0
  %961 = vmatpush1.xpose.msra.mxu0 0.0
  %962 = vmatprep.subr.mxu0 0.0
  %963 = vmatpush1.xpose.msra.mxu0 0.0
  %964 = vmatprep.subr.mxu0 0.0
  %965 = vmatpush1.xpose.msra.mxu0 0.0
  %966 = vmatprep.subr.mxu0 0.0
  %967 = vmatpush1.xpose.msra.mxu0 0.0
  %968 = vmatprep.subr.mxu0 0.0
  %969 = vmatpush1.xpose.msra.mxu0 0.0
  %970 = vmatprep.subr.mxu0 0.0
  %971 = vmatpush1.xpose.msra.mxu0 0.0
  %972 = vmatprep.subr.mxu0 0.0
  %973 = vmatpush1.xpose.msra.mxu0 0.0
  %974 = vmatprep.subr.mxu0 0.0
  %975 = vmatpush1.xpose.msra.mxu0 0.0
  %976 = vmatprep.subr.mxu0 0.0
  %977 = vmatpush1.xpose.msra.mxu0 0.0
  %978 = vmatprep.subr.mxu0 0.0
  %979 = vmatpush1.xpose.msra.mxu0 0.0
  %980 = vmatprep.subr.mxu0 0.0
  %981 = vmatpush1.xpose.msra.mxu0 0.0
  %982 = vmatprep.subr.mxu0 0.0
  %983 = vmatpush1.xpose.msra.mxu0 0.0
  %984 = vmatprep.subr.mxu0 0.0
  %985 = vmatpush1.xpose.msra.mxu0 0.0
  %986 = vmatprep.subr.mxu0 0.0
  %987 = vmatpush1.xpose.msra.mxu0 0.0
  %988 = vmatprep.subr.mxu0 0.0
  %989 = vmatpush1.xpose.msra.mxu0 0.0
  %990 = vmatprep.subr.mxu0 0.0
  %991 = vmatpush1.xpose.msra.mxu0 %v958
  %992 = vmatprep.subr.mxu0 0.0
  %993 = vmatpush2.xpose.msra.mxu0 0.0
  %994 = vmatprep.subr.mxu0 0.0
  %995 = vmatpush2.xpose.msra.mxu0 0.0
  %996 = vmatprep.subr.mxu0 0.0
  %997 = vmatpush2.xpose.msra.mxu0 0.0
  %998 = vmatprep.subr.mxu0 0.0
  %999 = vmatpush2.xpose.msra.mxu0 0.0
  %1000 = vmatprep.subr.mxu0 0.0
  %1001 = vmatpush2.xpose.msra.mxu0 0.0
  %1002 = vmatprep.subr.mxu0 0.0
  %1003 = vmatpush2.xpose.msra.mxu0 0.0
  %1004 = vmatprep.subr.mxu0 0.0
  %1005 = vmatpush2.xpose.msra.mxu0 0.0
  %1006 = vmatprep.subr.mxu0 0.0
  %1007 = vmatpush2.xpose.msra.mxu0 0.0
  %1008 = vmatprep.subr.mxu0 0.0
  %1009 = vmatpush2.xpose.msra.mxu0 0.0
  %1010 = vmatprep.subr.mxu0 0.0
  %1011 = vmatpush2.xpose.msra.mxu0 0.0
  %1012 = vmatprep.subr.mxu0 0.0
  %1013 = vmatpush2.xpose.msra.mxu0 0.0
  %1014 = vmatprep.subr.mxu0 0.0
  %1015 = vmatpush2.xpose.msra.mxu0 0.0
  %1016 = vmatprep.subr.mxu0 0.0
  %1017 = vmatpush2.xpose.msra.mxu0 0.0
  %1018 = vmatprep.subr.mxu0 0.0
  %1019 = vmatpush2.xpose.msra.mxu0 0.0
  %1020 = vmatprep.subr.mxu0 0.0
  %1021 = vmatpush2.xpose.msra.mxu0 0.0
  %1022 = vmatprep.subr.mxu0 0.0
  %1023 = vmatpush2.xpose.msra.mxu0 0.0
  %1024 = vmatprep.mubr.f32.mxu0 0.0
  %1025 = vmatmul.mubr.f32.gmra.mxu0 %v956
  %v1026 = vpop.f32.mrf.mxu0
  %v1027 = vadd.f32 0.0, %v1026
  %v1028 = vpop.f32.mrf.mxu0
  %1029 = vdwg.mxu0
  %v1030 = vmul.f32 %v1027, 0.17677669
  %v1031 = vld [vmem:[%s0 + $0x90] sm:$0xff]
  %v1032 = vadd.f32 %v1030, %v1031
  %vm1033 = vcmask 64512
  %v1034 = vsel %vm1033, %v1032, -inf
  %1035 = vmax.xlane.f32.xlu0 %v1034
  %v1036 = vpop.xlane.xlu0 %1035
  %v1037 = vsub.f32 %v1032, %v1036
  %v1038 = vmul.f32 %v1037, 1.442695
  %v1039 = vpow.pop %v1038
  %v1040 = vsel %vm1033, %v1039, 0.0
  %1041 = vadd.xlane.f32.xlu0 %v1040
  %v1042 = vpop.xlane.xlu0 %1041
  %v1043 = vrcp.pop %v1042
  %v1044 = vmul.f32 %v1039, %v1043
  %1045 = vrot.lane.b32.xlu0 %v950, 64
  %v1046 = vpop.permute.xlu0 %1045
  %v1049 = vsel %vm1033, %v1044, 0
  %1051 = vmatprep.subr.mxu0 0.0
  %1052 = vmatpush1.msra.mxu0 0.0
  %1053 = vmatprep.subr.mxu0 0.0
  %1054 = vmatpush1.msra.mxu0 0.0
  %1055 = vmatprep.subr.mxu0 0.0
  %1056 = vmatpush1.msra.mxu0 0.0
  %1057 = vmatprep.subr.mxu0 0.0
  %1058 = vmatpush1.msra.mxu0 0.0
  %1059 = vmatprep.subr.mxu0 0.0
  %1060 = vmatpush1.msra.mxu0 0.0
  %1061 = vmatprep.subr.mxu0 0.0
  %1062 = vmatpush1.msra.mxu0 0.0
  %1063 = vmatprep.subr.mxu0 0.0
  %1064 = vmatpush1.msra.mxu0 0.0
  %1065 = vmatprep.subr.mxu0 0.0
  %1066 = vmatpush1.msra.mxu0 0.0
  %1067 = vmatprep.subr.mxu0 0.0
  %1068 = vmatpush1.msra.mxu0 0.0
  %1069 = vmatprep.subr.mxu0 0.0
  %1070 = vmatpush1.msra.mxu0 0.0
  %1071 = vmatprep.subr.mxu0 0.0
  %1072 = vmatpush1.msra.mxu0 0.0
  %1073 = vmatprep.subr.mxu0 0.0
  %1074 = vmatpush1.msra.mxu0 0.0
  %1075 = vmatprep.subr.mxu0 0.0
  %1076 = vmatpush1.msra.mxu0 0.0
  %1077 = vmatprep.subr.mxu0 0.0
  %1078 = vmatpush1.msra.mxu0 0.0
  %1079 = vmatprep.subr.mxu0 0.0
  %1080 = vmatpush1.msra.mxu0 0.0
  %1081 = vmatprep.subr.mxu0 0.0
  %1082 = vmatpush1.msra.mxu0 %v1046
  %1083 = vmatprep.subr.mxu0 0.0
  %1084 = vmatpush2.msra.mxu0 0.0
  %1085 = vmatprep.subr.mxu0 0.0
  %1086 = vmatpush2.msra.mxu0 0.0
  %1087 = vmatprep.subr.mxu0 0.0
  %1088 = vmatpush2.msra.mxu0 0.0
  %1089 = vmatprep.subr.mxu0 0.0
  %1090 = vmatpush2.msra.mxu0 0.0
  %1091 = vmatprep.subr.mxu0 0.0
  %1092 = vmatpush2.msra.mxu0 0.0
  %1093 = vmatprep.subr.mxu0 0.0
  %1094 = vmatpush2.msra.mxu0 0.0
  %1095 = vmatprep.subr.mxu0 0.0
  %1096 = vmatpush2.msra.mxu0 0.0
  %1097 = vmatprep.subr.mxu0 0.0
  %1098 = vmatpush2.msra.mxu0 0.0
  %1099 = vmatprep.subr.mxu0 0.0
  %1100 = vmatpush2.msra.mxu0 0.0
  %1101 = vmatprep.subr.mxu0 0.0
  %1102 = vmatpush2.msra.mxu0 0.0
  %1103 = vmatprep.subr.mxu0 0.0
  %1104 = vmatpush2.msra.mxu0 0.0
  %1105 = vmatprep.subr.mxu0 0.0
  %1106 = vmatpush2.msra.mxu0 0.0
  %1107 = vmatprep.subr.mxu0 0.0
  %1108 = vmatpush2.msra.mxu0 0.0
  %1109 = vmatprep.subr.mxu0 0.0
  %1110 = vmatpush2.msra.mxu0 0.0
  %1111 = vmatprep.subr.mxu0 0.0
  %1112 = vmatpush2.msra.mxu0 0.0
  %1113 = vmatprep.subr.mxu0 0.0
  %1114 = vmatpush2.msra.mxu0 0.0
  %1115 = vmatprep.mubr.f32.mxu0 0.0
  %1116 = vmatmul.mubr.f32.gmra.mxu0 %v1049
  %v1117 = vpop.f32.mrf.mxu0
  %v1118 = vadd.f32 0.0, %v1117
  %v1119 = vpop.f32.mrf.mxu0
  %1120 = vdwg.mxu0
  %v1121 = vld [vmem:[%s1 + $0x40] sm:$0xff]
  %v1122 = vld [vmem:[%s1 + $0x48] sm:$0xff]
  %v1123 = vld [vmem:[%s1 + $0x50] sm:$0xff]
  %v1124 = vld [vmem:[%s1 + $0x58] sm:$0xff]
  %v1126 = vsel %vm16, %v1118, 0
  %1128 = vmatprep.subr.mxu0 0.0
  %1129 = vmatpush1.msra.mxu0 0.0
  %1130 = vmatprep.subr.mxu0 0.0
  %1131 = vmatpush1.msra.mxu0 0.0
  %1132 = vmatprep.subr.mxu0 0.0
  %1133 = vmatpush1.msra.mxu0 0.0
  %1134 = vmatprep.subr.mxu0 0.0
  %1135 = vmatpush1.msra.mxu0 0.0
  %1136 = vmatprep.subr.mxu0 0.0
  %1137 = vmatpush1.msra.mxu0 0.0
  %1138 = vmatprep.subr.mxu0 0.0
  %1139 = vmatpush1.msra.mxu0 0.0
  %1140 = vmatprep.subr.mxu0 0.0
  %1141 = vmatpush1.msra.mxu0 0.0
  %1142 = vmatprep.subr.mxu0 0.0
  %1143 = vmatpush1.msra.mxu0 0.0
  %1144 = vmatprep.subr.mxu0 0.0
  %1145 = vmatpush1.msra.mxu0 0.0
  %1146 = vmatprep.subr.mxu0 0.0
  %1147 = vmatpush1.msra.mxu0 0.0
  %1148 = vmatprep.subr.mxu0 0.0
  %1149 = vmatpush1.msra.mxu0 0.0
  %1150 = vmatprep.subr.mxu0 0.0
  %1151 = vmatpush1.msra.mxu0 0.0
  %1152 = vmatprep.subr.mxu0 0.0
  %1153 = vmatpush1.msra.mxu0 %v1124
  %1154 = vmatprep.subr.mxu0 0.0
  %1155 = vmatpush1.msra.mxu0 %v1123
  %1156 = vmatprep.subr.mxu0 0.0
  %1157 = vmatpush1.msra.mxu0 %v1122
  %1158 = vmatprep.subr.mxu0 0.0
  %1159 = vmatpush1.msra.mxu0 %v1121
  %1160 = vmatprep.subr.mxu0 0.0
  %1161 = vmatpush2.msra.mxu0 0.0
  %1162 = vmatprep.subr.mxu0 0.0
  %1163 = vmatpush2.msra.mxu0 0.0
  %1164 = vmatprep.subr.mxu0 0.0
  %1165 = vmatpush2.msra.mxu0 0.0
  %1166 = vmatprep.subr.mxu0 0.0
  %1167 = vmatpush2.msra.mxu0 0.0
  %1168 = vmatprep.subr.mxu0 0.0
  %1169 = vmatpush2.msra.mxu0 0.0
  %1170 = vmatprep.subr.mxu0 0.0
  %1171 = vmatpush2.msra.mxu0 0.0
  %1172 = vmatprep.subr.mxu0 0.0
  %1173 = vmatpush2.msra.mxu0 0.0
  %1174 = vmatprep.subr.mxu0 0.0
  %1175 = vmatpush2.msra.mxu0 0.0
  %1176 = vmatprep.subr.mxu0 0.0
  %1177 = vmatpush2.msra.mxu0 0.0
  %1178 = vmatprep.subr.mxu0 0.0
  %1179 = vmatpush2.msra.mxu0 0.0
  %1180 = vmatprep.subr.mxu0 0.0
  %1181 = vmatpush2.msra.mxu0 0.0
  %1182 = vmatprep.subr.mxu0 0.0
  %1183 = vmatpush2.msra.mxu0 0.0
  %1184 = vmatprep.subr.mxu0 0.0
  %1185 = vmatpush2.msra.mxu0 0.0
  %1186 = vmatprep.subr.mxu0 0.0
  %1187 = vmatpush2.msra.mxu0 0.0
  %1188 = vmatprep.subr.mxu0 0.0
  %1189 = vmatpush2.msra.mxu0 0.0
  %1190 = vmatprep.subr.mxu0 0.0
  %1191 = vmatpush2.msra.mxu0 0.0
  %1192 = vmatprep.mubr.f32.mxu0 0.0
  %1193 = vmatmul.mubr.f32.gmra.mxu0 %v1126
  %v1194 = vpop.f32.mrf.mxu0
  %v1195 = vadd.f32 0.0, %v1194
  %v1196 = vpop.f32.mrf.mxu0
  %1197 = vdwg.mxu0
  %v1198 = vadd.f32 %v856, %v1195
  %v1199 = vld [vmem:[%s1 + $0xa1] sm:$0x1]
  %v1200 = vlaneseq
  %v1201 = vshrl.u32 %v1200, 7
  %v1202 = vsub.s32 0, %v1201
  %v1203 = vrot.slane %v1199, %v1202
  %v1204 = vadd.f32 %v1198, %v1203
  %v1205 = vld [vmem:[%s0 + $0x40] sm:$0xff]
  %v1206 = vld [vmem:[%s1 + $0x60] sm:$0xff]
  %v1207 = vld [vmem:[%s1 + $0x68] sm:$0xff]
  %v1208 = vld [vmem:[%s1 + $0x70] sm:$0xff]
  %v1209 = vld [vmem:[%s1 + $0x78] sm:$0xff]
  %v1211 = vsel %vm16, %v1204, 0
  %1213 = vmatprep.subr.mxu0 0.0
  %1214 = vmatpush1.msra.mxu0 0.0
  %1215 = vmatprep.subr.mxu0 0.0
  %1216 = vmatpush1.msra.mxu0 0.0
  %1217 = vmatprep.subr.mxu0 0.0
  %1218 = vmatpush1.msra.mxu0 0.0
  %1219 = vmatprep.subr.mxu0 0.0
  %1220 = vmatpush1.msra.mxu0 0.0
  %1221 = vmatprep.subr.mxu0 0.0
  %1222 = vmatpush1.msra.mxu0 0.0
  %1223 = vmatprep.subr.mxu0 0.0
  %1224 = vmatpush1.msra.mxu0 0.0
  %1225 = vmatprep.subr.mxu0 0.0
  %1226 = vmatpush1.msra.mxu0 0.0
  %1227 = vmatprep.subr.mxu0 0.0
  %1228 = vmatpush1.msra.mxu0 0.0
  %1229 = vmatprep.subr.mxu0 0.0
  %1230 = vmatpush1.msra.mxu0 0.0
  %1231 = vmatprep.subr.mxu0 0.0
  %1232 = vmatpush1.msra.mxu0 0.0
  %1233 = vmatprep.subr.mxu0 0.0
  %1234 = vmatpush1.msra.mxu0 0.0
  %1235 = vmatprep.subr.mxu0 0.0
  %1236 = vmatpush1.msra.mxu0 0.0
  %1237 = vmatprep.subr.mxu0 0.0
  %1238 = vmatpush1.msra.mxu0 %v1209
  %1239 = vmatprep.subr.mxu0 0.0
  %1240 = vmatpush1.msra.mxu0 %v1208
  %1241 = vmatprep.subr.mxu0 0.0
  %1242 = vmatpush1.msra.mxu0 %v1207
  %1243 = vmatprep.subr.mxu0 0.0
  %1244 = vmatpush1.msra.mxu0 %v1206
  %1245 = vmatprep.subr.mxu0 0.0
  %1246 = vmatpush2.msra.mxu0 0.0
  %1247 = vmatprep.subr.mxu0 0.0
  %1248 = vmatpush2.msra.mxu0 0.0
  %1249 = vmatprep.subr.mxu0 0.0
  %1250 = vmatpush2.msra.mxu0 0.0
  %1251 = vmatprep.subr.mxu0 0.0
  %1252 = vmatpush2.msra.mxu0 0.0
  %1253 = vmatprep.subr.mxu0 0.0
  %1254 = vmatpush2.msra.mxu0 0.0
  %1255 = vmatprep.subr.mxu0 0.0
  %1256 = vmatpush2.msra.mxu0 0.0
  %1257 = vmatprep.subr.mxu0 0.0
  %1258 = vmatpush2.msra.mxu0 0.0
  %1259 = vmatprep.subr.mxu0 0.0
  %1260 = vmatpush2.msra.mxu0 0.0
  %1261 = vmatprep.subr.mxu0 0.0
  %1262 = vmatpush2.msra.mxu0 0.0
  %1263 = vmatprep.subr.mxu0 0.0
  %1264 = vmatpush2.msra.mxu0 0.0
  %1265 = vmatprep.subr.mxu0 0.0
  %1266 = vmatpush2.msra.mxu0 0.0
  %1267 = vmatprep.subr.mxu0 0.0
  %1268 = vmatpush2.msra.mxu0 0.0
  %1269 = vmatprep.subr.mxu0 0.0
  %1270 = vmatpush2.msra.mxu0 0.0
  %1271 = vmatprep.subr.mxu0 0.0
  %1272 = vmatpush2.msra.mxu0 0.0
  %1273 = vmatprep.subr.mxu0 0.0
  %1274 = vmatpush2.msra.mxu0 0.0
  %1275 = vmatprep.subr.mxu0 0.0
  %1276 = vmatpush2.msra.mxu0 0.0
  %1277 = vmatprep.mubr.f32.mxu0 0.0
  %1278 = vmatmul.mubr.f32.gmra.mxu0 %v1211
  %v1279 = vpop.f32.mrf.mxu0
  %v1280 = vadd.f32 0.0, %v1279
  %v1281 = vpop.f32.mrf.mxu0
  %1282 = vdwg.mxu0
  %v1283 = vadd.f32 %v1205, %v1280
  %v1284 = vxor.u32 %v1283, 2147483648
  %v1285 = vmul.f32 %v1284, 1.442695
  %v1286 = vpow.pop %v1285
  %v1287 = vadd.f32 %v1286, 1.0
  %v1288 = vrcp.pop %v1287
  %v1289 = vmul.f32 1.0, %v1288
  %v1290 = vtanh.pop %v1283
  %v1291 = vmul.f32 %v1289, 0.0
  %1293 = vrot.lane.b32.xlu0 %v1290, 32
  %v1294 = vpop.permute.xlu0 %1293
  %v1296 = vmul.f32 %v1289, %v1294
  %1298 = vrot.lane.b32.xlu0 %v1296, 32
  %v1299 = vpop.permute.xlu0 %1298
  %v1301 = vadd.f32 %v1291, %v1299
  %v1302 = vtanh.pop %v1301
  %1304 = vrot.lane.b32.xlu0 %v1302, 32
  %v1305 = vpop.permute.xlu0 %1304
  %v1307 = vmul.f32 %v1289, %v1305
  %v1308 = vld [vmem:[%s1 + $0x80] sm:$0xff]
  %v1309 = vld [vmem:[%s1 + $0x88] sm:$0xff]
  %v1310 = vld [vmem:[%s1 + $0x90] sm:$0xff]
  %v1311 = vld [vmem:[%s1 + $0x98] sm:$0xff]
  %v1312 = vld [vmem:[%s1 + $0xa2] sm:$0x1]
  %v1313 = vlaneseq
  %v1314 = vshrl.u32 %v1313, 7
  %v1315 = vsub.s32 0, %v1314
  %v1316 = vrot.slane %v1312, %v1315
  %1318 = vrot.lane.b32.xlu0 %v1307, 64
  %v1319 = vpop.permute.xlu0 %1318
  %v1320 = vsel %vm16, %v1319, 0
  %1322 = vmatprep.subr.mxu0 0.0
  %1323 = vmatpush1.msra.mxu0 0.0
  %1324 = vmatprep.subr.mxu0 0.0
  %1325 = vmatpush1.msra.mxu0 0.0
  %1326 = vmatprep.subr.mxu0 0.0
  %1327 = vmatpush1.msra.mxu0 0.0
  %1328 = vmatprep.subr.mxu0 0.0
  %1329 = vmatpush1.msra.mxu0 0.0
  %1330 = vmatprep.subr.mxu0 0.0
  %1331 = vmatpush1.msra.mxu0 0.0
  %1332 = vmatprep.subr.mxu0 0.0
  %1333 = vmatpush1.msra.mxu0 0.0
  %1334 = vmatprep.subr.mxu0 0.0
  %1335 = vmatpush1.msra.mxu0 0.0
  %1336 = vmatprep.subr.mxu0 0.0
  %1337 = vmatpush1.msra.mxu0 0.0
  %1338 = vmatprep.subr.mxu0 0.0
  %1339 = vmatpush1.msra.mxu0 0.0
  %1340 = vmatprep.subr.mxu0 0.0
  %1341 = vmatpush1.msra.mxu0 0.0
  %1342 = vmatprep.subr.mxu0 0.0
  %1343 = vmatpush1.msra.mxu0 0.0
  %1344 = vmatprep.subr.mxu0 0.0
  %1345 = vmatpush1.msra.mxu0 0.0
  %1346 = vmatprep.subr.mxu0 0.0
  %1347 = vmatpush1.msra.mxu0 %v1311
  %1348 = vmatprep.subr.mxu0 0.0
  %1349 = vmatpush1.msra.mxu0 %v1310
  %1350 = vmatprep.subr.mxu0 0.0
  %1351 = vmatpush1.msra.mxu0 %v1309
  %1352 = vmatprep.subr.mxu0 0.0
  %1353 = vmatpush1.msra.mxu0 %v1308
  %1354 = vmatprep.subr.mxu0 0.0
  %1355 = vmatpush2.msra.mxu0 0.0
  %1356 = vmatprep.subr.mxu0 0.0
  %1357 = vmatpush2.msra.mxu0 0.0
  %1358 = vmatprep.subr.mxu0 0.0
  %1359 = vmatpush2.msra.mxu0 0.0
  %1360 = vmatprep.subr.mxu0 0.0
  %1361 = vmatpush2.msra.mxu0 0.0
  %1362 = vmatprep.subr.mxu0 0.0
  %1363 = vmatpush2.msra.mxu0 0.0
  %1364 = vmatprep.subr.mxu0 0.0
  %1365 = vmatpush2.msra.mxu0 0.0
  %1366 = vmatprep.subr.mxu0 0.0
  %1367 = vmatpush2.msra.mxu0 0.0
  %1368 = vmatprep.subr.mxu0 0.0
  %1369 = vmatpush2.msra.mxu0 0.0
  %1370 = vmatprep.subr.mxu0 0.0
  %1371 = vmatpush2.msra.mxu0 0.0
  %1372 = vmatprep.subr.mxu0 0.0
  %1373 = vmatpush2.msra.mxu0 0.0
  %1374 = vmatprep.subr.mxu0 0.0
  %1375 = vmatpush2.msra.mxu0 0.0
  %1376 = vmatprep.subr.mxu0 0.0
  %1377 = vmatpush2.msra.mxu0 0.0
  %1378 = vmatprep.subr.mxu0 0.0
  %1379 = vmatpush2.msra.mxu0 0.0
  %1380 = vmatprep.subr.mxu0 0.0
  %1381 = vmatpush2.msra.mxu0 0.0
  %1382 = vmatprep.subr.mxu0 0.0
  %1383 = vmatpush2.msra.mxu0 0.0
  %1384 = vmatprep.subr.mxu0 0.0
  %1385 = vmatpush2.msra.mxu0 0.0
  %1386 = vmatprep.mubr.f32.mxu0 0.0
  %1387 = vmatmul.mubr.f32.gmra.mxu0 %v1320
  %v1388 = vpop.f32.mrf.mxu0
  %v1389 = vadd.f32 %v1316, %v1388
  %v1390 = vpop.f32.mrf.mxu0
  %1391 = vdwg.mxu0
  %v1392 = vxor.u32 %v1389, 2147483648
  %v1393 = vmul.f32 %v1392, 1.442695
  %v1394 = vpow.pop %v1393
  %v1395 = vadd.f32 %v1394, 1.0
  %v1396 = vrcp.pop %v1395
  %v1397 = vmul.f32 1.0, %v1396
  %v1398 = vtanh.pop %v1389
  %v1399 = vmul.f32 %v1397, %v1301
  %1401 = vrot.lane.b32.xlu0 %v1398, 32
  %v1402 = vpop.permute.xlu0 %1401
  %v1404 = vmul.f32 %v1397, %v1402
  %1406 = vrot.lane.b32.xlu0 %v1404, 32
  %v1407 = vpop.permute.xlu0 %1406
  %v1409 = vadd.f32 %v1399, %v1407
  %v1410 = vtanh.pop %v1409
  %1412 = vrot.lane.b32.xlu0 %v1410, 32
  %v1413 = vpop.permute.xlu0 %1412
  %v1415 = vmul.f32 %v1397, %v1413
  %1417 = vrot.lane.b32.xlu0 %v1415, 64
  %v1418 = vpop.permute.xlu0 %1417
  %v1419 = vsel %vm16, %v1418, 0
  %1421 = vmatprep.subr.mxu0 0.0
  %1422 = vmatpush1.msra.mxu0 0.0
  %1423 = vmatprep.subr.mxu0 0.0
  %1424 = vmatpush1.msra.mxu0 0.0
  %1425 = vmatprep.subr.mxu0 0.0
  %1426 = vmatpush1.msra.mxu0 0.0
  %1427 = vmatprep.subr.mxu0 0.0
  %1428 = vmatpush1.msra.mxu0 0.0
  %1429 = vmatprep.subr.mxu0 0.0
  %1430 = vmatpush1.msra.mxu0 0.0
  %1431 = vmatprep.subr.mxu0 0.0
  %1432 = vmatpush1.msra.mxu0 0.0
  %1433 = vmatprep.subr.mxu0 0.0
  %1434 = vmatpush1.msra.mxu0 0.0
  %1435 = vmatprep.subr.mxu0 0.0
  %1436 = vmatpush1.msra.mxu0 0.0
  %1437 = vmatprep.subr.mxu0 0.0
  %1438 = vmatpush1.msra.mxu0 0.0
  %1439 = vmatprep.subr.mxu0 0.0
  %1440 = vmatpush1.msra.mxu0 0.0
  %1441 = vmatprep.subr.mxu0 0.0
  %1442 = vmatpush1.msra.mxu0 0.0
  %1443 = vmatprep.subr.mxu0 0.0
  %1444 = vmatpush1.msra.mxu0 0.0
  %1445 = vmatprep.subr.mxu0 0.0
  %1446 = vmatpush1.msra.mxu0 %v1311
  %1447 = vmatprep.subr.mxu0 0.0
  %1448 = vmatpush1.msra.mxu0 %v1310
  %1449 = vmatprep.subr.mxu0 0.0
  %1450 = vmatpush1.msra.mxu0 %v1309
  %1451 = vmatprep.subr.mxu0 0.0
  %1452 = vmatpush1.msra.mxu0 %v1308
  %1453 = vmatprep.subr.mxu0 0.0
  %1454 = vmatpush2.msra.mxu0 0.0
  %1455 = vmatprep.subr.mxu0 0.0
  %1456 = vmatpush2.msra.mxu0 0.0
  %1457 = vmatprep.subr.mxu0 0.0
  %1458 = vmatpush2.msra.mxu0 0.0
  %1459 = vmatprep.subr.mxu0 0.0
  %1460 = vmatpush2.msra.mxu0 0.0
  %1461 = vmatprep.subr.mxu0 0.0
  %1462 = vmatpush2.msra.mxu0 0.0
  %1463 = vmatprep.subr.mxu0 0.0
  %1464 = vmatpush2.msra.mxu0 0.0
  %1465 = vmatprep.subr.mxu0 0.0
  %1466 = vmatpush2.msra.mxu0 0.0
  %1467 = vmatprep.subr.mxu0 0.0
  %1468 = vmatpush2.msra.mxu0 0.0
  %1469 = vmatprep.subr.mxu0 0.0
  %1470 = vmatpush2.msra.mxu0 0.0
  %1471 = vmatprep.subr.mxu0 0.0
  %1472 = vmatpush2.msra.mxu0 0.0
  %1473 = vmatprep.subr.mxu0 0.0
  %1474 = vmatpush2.msra.mxu0 0.0
  %1475 = vmatprep.subr.mxu0 0.0
  %1476 = vmatpush2.msra.mxu0 0.0
  %1477 = vmatprep.subr.mxu0 0.0
  %1478 = vmatpush2.msra.mxu0 0.0
  %1479 = vmatprep.subr.mxu0 0.0
  %1480 = vmatpush2.msra.mxu0 0.0
  %1481 = vmatprep.subr.mxu0 0.0
  %1482 = vmatpush2.msra.mxu0 0.0
  %1483 = vmatprep.subr.mxu0 0.0
  %1484 = vmatpush2.msra.mxu0 0.0
  %1485 = vmatprep.mubr.f32.mxu0 0.0
  %1486 = vmatmul.mubr.f32.gmra.mxu0 %v1419
  %v1487 = vpop.f32.mrf.mxu0
  %v1488 = vadd.f32 %v1316, %v1487
  %v1489 = vpop.f32.mrf.mxu0
  %1490 = vdwg.mxu0
  %v1491 = vxor.u32 %v1488, 2147483648
  %v1492 = vmul.f32 %v1491, 1.442695
  %v1493 = vpow.pop %v1492
  %v1494 = vadd.f32 %v1493, 1.0
  %v1495 = vrcp.pop %v1494
  %v1496 = vmul.f32 1.0, %v1495
  %v1497 = vtanh.pop %v1488
  %v1498 = vmul.f32 %v1496, %v1409
  %1500 = vrot.lane.b32.xlu0 %v1497, 32
  %v1501 = vpop.permute.xlu0 %1500
  %v1503 = vmul.f32 %v1496, %v1501
  %1505 = vrot.lane.b32.xlu0 %v1503, 32
  %v1506 = vpop.permute.xlu0 %1505
  %v1508 = vadd.f32 %v1498, %v1506
  %v1509 = vtanh.pop %v1508
  %1511 = vrot.lane.b32.xlu0 %v1509, 32
  %v1512 = vpop.permute.xlu0 %1511
  %v1514 = vmul.f32 %v1496, %v1512
  %1516 = vrot.lane.b32.xlu0 %v1514, 64
  %v1517 = vpop.permute.xlu0 %1516
  %v1518 = vsel %vm16, %v1517, 0
  %1520 = vmatprep.subr.mxu0 0.0
  %1521 = vmatpush1.msra.mxu0 0.0
  %1522 = vmatprep.subr.mxu0 0.0
  %1523 = vmatpush1.msra.mxu0 0.0
  %1524 = vmatprep.subr.mxu0 0.0
  %1525 = vmatpush1.msra.mxu0 0.0
  %1526 = vmatprep.subr.mxu0 0.0
  %1527 = vmatpush1.msra.mxu0 0.0
  %1528 = vmatprep.subr.mxu0 0.0
  %1529 = vmatpush1.msra.mxu0 0.0
  %1530 = vmatprep.subr.mxu0 0.0
  %1531 = vmatpush1.msra.mxu0 0.0
  %1532 = vmatprep.subr.mxu0 0.0
  %1533 = vmatpush1.msra.mxu0 0.0
  %1534 = vmatprep.subr.mxu0 0.0
  %1535 = vmatpush1.msra.mxu0 0.0
  %1536 = vmatprep.subr.mxu0 0.0
  %1537 = vmatpush1.msra.mxu0 0.0
  %1538 = vmatprep.subr.mxu0 0.0
  %1539 = vmatpush1.msra.mxu0 0.0
  %1540 = vmatprep.subr.mxu0 0.0
  %1541 = vmatpush1.msra.mxu0 0.0
  %1542 = vmatprep.subr.mxu0 0.0
  %1543 = vmatpush1.msra.mxu0 0.0
  %1544 = vmatprep.subr.mxu0 0.0
  %1545 = vmatpush1.msra.mxu0 %v1311
  %1546 = vmatprep.subr.mxu0 0.0
  %1547 = vmatpush1.msra.mxu0 %v1310
  %1548 = vmatprep.subr.mxu0 0.0
  %1549 = vmatpush1.msra.mxu0 %v1309
  %1550 = vmatprep.subr.mxu0 0.0
  %1551 = vmatpush1.msra.mxu0 %v1308
  %1552 = vmatprep.subr.mxu0 0.0
  %1553 = vmatpush2.msra.mxu0 0.0
  %1554 = vmatprep.subr.mxu0 0.0
  %1555 = vmatpush2.msra.mxu0 0.0
  %1556 = vmatprep.subr.mxu0 0.0
  %1557 = vmatpush2.msra.mxu0 0.0
  %1558 = vmatprep.subr.mxu0 0.0
  %1559 = vmatpush2.msra.mxu0 0.0
  %1560 = vmatprep.subr.mxu0 0.0
  %1561 = vmatpush2.msra.mxu0 0.0
  %1562 = vmatprep.subr.mxu0 0.0
  %1563 = vmatpush2.msra.mxu0 0.0
  %1564 = vmatprep.subr.mxu0 0.0
  %1565 = vmatpush2.msra.mxu0 0.0
  %1566 = vmatprep.subr.mxu0 0.0
  %1567 = vmatpush2.msra.mxu0 0.0
  %1568 = vmatprep.subr.mxu0 0.0
  %1569 = vmatpush2.msra.mxu0 0.0
  %1570 = vmatprep.subr.mxu0 0.0
  %1571 = vmatpush2.msra.mxu0 0.0
  %1572 = vmatprep.subr.mxu0 0.0
  %1573 = vmatpush2.msra.mxu0 0.0
  %1574 = vmatprep.subr.mxu0 0.0
  %1575 = vmatpush2.msra.mxu0 0.0
  %1576 = vmatprep.subr.mxu0 0.0
  %1577 = vmatpush2.msra.mxu0 0.0
  %1578 = vmatprep.subr.mxu0 0.0
  %1579 = vmatpush2.msra.mxu0 0.0
  %1580 = vmatprep.subr.mxu0 0.0
  %1581 = vmatpush2.msra.mxu0 0.0
  %1582 = vmatprep.subr.mxu0 0.0
  %1583 = vmatpush2.msra.mxu0 0.0
  %1584 = vmatprep.mubr.f32.mxu0 0.0
  %1585 = vmatmul.mubr.f32.gmra.mxu0 %v1518
  %v1586 = vpop.f32.mrf.mxu0
  %v1587 = vadd.f32 %v1316, %v1586
  %v1588 = vpop.f32.mrf.mxu0
  %1589 = vdwg.mxu0
  %v1590 = vxor.u32 %v1587, 2147483648
  %v1591 = vmul.f32 %v1590, 1.442695
  %v1592 = vpow.pop %v1591
  %v1593 = vadd.f32 %v1592, 1.0
  %v1594 = vrcp.pop %v1593
  %v1595 = vmul.f32 1.0, %v1594
  %v1596 = vtanh.pop %v1587
  %v1597 = vmul.f32 %v1595, %v1508
  %1599 = vrot.lane.b32.xlu0 %v1596, 32
  %v1600 = vpop.permute.xlu0 %1599
  %v1602 = vmul.f32 %v1595, %v1600
  %1604 = vrot.lane.b32.xlu0 %v1602, 32
  %v1605 = vpop.permute.xlu0 %1604
  %v1607 = vadd.f32 %v1597, %v1605
  %v1608 = vtanh.pop %v1607
  %1610 = vrot.lane.b32.xlu0 %v1608, 32
  %v1611 = vpop.permute.xlu0 %1610
  %v1613 = vmul.f32 %v1595, %v1611
  %1615 = vrot.lane.b32.xlu0 %v1613, 64
  %v1616 = vpop.permute.xlu0 %1615
  %v1617 = vsel %vm16, %v1616, 0
  %1619 = vmatprep.subr.mxu0 0.0
  %1620 = vmatpush1.msra.mxu0 0.0
  %1621 = vmatprep.subr.mxu0 0.0
  %1622 = vmatpush1.msra.mxu0 0.0
  %1623 = vmatprep.subr.mxu0 0.0
  %1624 = vmatpush1.msra.mxu0 0.0
  %1625 = vmatprep.subr.mxu0 0.0
  %1626 = vmatpush1.msra.mxu0 0.0
  %1627 = vmatprep.subr.mxu0 0.0
  %1628 = vmatpush1.msra.mxu0 0.0
  %1629 = vmatprep.subr.mxu0 0.0
  %1630 = vmatpush1.msra.mxu0 0.0
  %1631 = vmatprep.subr.mxu0 0.0
  %1632 = vmatpush1.msra.mxu0 0.0
  %1633 = vmatprep.subr.mxu0 0.0
  %1634 = vmatpush1.msra.mxu0 0.0
  %1635 = vmatprep.subr.mxu0 0.0
  %1636 = vmatpush1.msra.mxu0 0.0
  %1637 = vmatprep.subr.mxu0 0.0
  %1638 = vmatpush1.msra.mxu0 0.0
  %1639 = vmatprep.subr.mxu0 0.0
  %1640 = vmatpush1.msra.mxu0 0.0
  %1641 = vmatprep.subr.mxu0 0.0
  %1642 = vmatpush1.msra.mxu0 0.0
  %1643 = vmatprep.subr.mxu0 0.0
  %1644 = vmatpush1.msra.mxu0 %v1311
  %1645 = vmatprep.subr.mxu0 0.0
  %1646 = vmatpush1.msra.mxu0 %v1310
  %1647 = vmatprep.subr.mxu0 0.0
  %1648 = vmatpush1.msra.mxu0 %v1309
  %1649 = vmatprep.subr.mxu0 0.0
  %1650 = vmatpush1.msra.mxu0 %v1308
  %1651 = vmatprep.subr.mxu0 0.0
  %1652 = vmatpush2.msra.mxu0 0.0
  %1653 = vmatprep.subr.mxu0 0.0
  %1654 = vmatpush2.msra.mxu0 0.0
  %1655 = vmatprep.subr.mxu0 0.0
  %1656 = vmatpush2.msra.mxu0 0.0
  %1657 = vmatprep.subr.mxu0 0.0
  %1658 = vmatpush2.msra.mxu0 0.0
  %1659 = vmatprep.subr.mxu0 0.0
  %1660 = vmatpush2.msra.mxu0 0.0
  %1661 = vmatprep.subr.mxu0 0.0
  %1662 = vmatpush2.msra.mxu0 0.0
  %1663 = vmatprep.subr.mxu0 0.0
  %1664 = vmatpush2.msra.mxu0 0.0
  %1665 = vmatprep.subr.mxu0 0.0
  %1666 = vmatpush2.msra.mxu0 0.0
  %1667 = vmatprep.subr.mxu0 0.0
  %1668 = vmatpush2.msra.mxu0 0.0
  %1669 = vmatprep.subr.mxu0 0.0
  %1670 = vmatpush2.msra.mxu0 0.0
  %1671 = vmatprep.subr.mxu0 0.0
  %1672 = vmatpush2.msra.mxu0 0.0
  %1673 = vmatprep.subr.mxu0 0.0
  %1674 = vmatpush2.msra.mxu0 0.0
  %1675 = vmatprep.subr.mxu0 0.0
  %1676 = vmatpush2.msra.mxu0 0.0
  %1677 = vmatprep.subr.mxu0 0.0
  %1678 = vmatpush2.msra.mxu0 0.0
  %1679 = vmatprep.subr.mxu0 0.0
  %1680 = vmatpush2.msra.mxu0 0.0
  %1681 = vmatprep.subr.mxu0 0.0
  %1682 = vmatpush2.msra.mxu0 0.0
  %1683 = vmatprep.mubr.f32.mxu0 0.0
  %1684 = vmatmul.mubr.f32.gmra.mxu0 %v1617
  %v1685 = vpop.f32.mrf.mxu0
  %v1686 = vadd.f32 %v1316, %v1685
  %v1687 = vpop.f32.mrf.mxu0
  %1688 = vdwg.mxu0
  %v1689 = vxor.u32 %v1686, 2147483648
  %v1690 = vmul.f32 %v1689, 1.442695
  %v1691 = vpow.pop %v1690
  %v1692 = vadd.f32 %v1691, 1.0
  %v1693 = vrcp.pop %v1692
  %v1694 = vmul.f32 1.0, %v1693
  %v1695 = vtanh.pop %v1686
  %v1696 = vmul.f32 %v1694, %v1607
  %1698 = vrot.lane.b32.xlu0 %v1695, 32
  %v1699 = vpop.permute.xlu0 %1698
  %v1701 = vmul.f32 %v1694, %v1699
  %1703 = vrot.lane.b32.xlu0 %v1701, 32
  %v1704 = vpop.permute.xlu0 %1703
  %v1706 = vadd.f32 %v1696, %v1704
  %v1707 = vtanh.pop %v1706
  %1709 = vrot.lane.b32.xlu0 %v1707, 32
  %v1710 = vpop.permute.xlu0 %1709
  %v1712 = vmul.f32 %v1694, %v1710
  %1714 = vrot.lane.b32.xlu0 %v1712, 64
  %v1715 = vpop.permute.xlu0 %1714
  %v1716 = vsel %vm16, %v1715, 0
  %1718 = vmatprep.subr.mxu0 0.0
  %1719 = vmatpush1.msra.mxu0 0.0
  %1720 = vmatprep.subr.mxu0 0.0
  %1721 = vmatpush1.msra.mxu0 0.0
  %1722 = vmatprep.subr.mxu0 0.0
  %1723 = vmatpush1.msra.mxu0 0.0
  %1724 = vmatprep.subr.mxu0 0.0
  %1725 = vmatpush1.msra.mxu0 0.0
  %1726 = vmatprep.subr.mxu0 0.0
  %1727 = vmatpush1.msra.mxu0 0.0
  %1728 = vmatprep.subr.mxu0 0.0
  %1729 = vmatpush1.msra.mxu0 0.0
  %1730 = vmatprep.subr.mxu0 0.0
  %1731 = vmatpush1.msra.mxu0 0.0
  %1732 = vmatprep.subr.mxu0 0.0
  %1733 = vmatpush1.msra.mxu0 0.0
  %1734 = vmatprep.subr.mxu0 0.0
  %1735 = vmatpush1.msra.mxu0 0.0
  %1736 = vmatprep.subr.mxu0 0.0
  %1737 = vmatpush1.msra.mxu0 0.0
  %1738 = vmatprep.subr.mxu0 0.0
  %1739 = vmatpush1.msra.mxu0 0.0
  %1740 = vmatprep.subr.mxu0 0.0
  %1741 = vmatpush1.msra.mxu0 0.0
  %1742 = vmatprep.subr.mxu0 0.0
  %1743 = vmatpush1.msra.mxu0 %v1311
  %1744 = vmatprep.subr.mxu0 0.0
  %1745 = vmatpush1.msra.mxu0 %v1310
  %1746 = vmatprep.subr.mxu0 0.0
  %1747 = vmatpush1.msra.mxu0 %v1309
  %1748 = vmatprep.subr.mxu0 0.0
  %1749 = vmatpush1.msra.mxu0 %v1308
  %1750 = vmatprep.subr.mxu0 0.0
  %1751 = vmatpush2.msra.mxu0 0.0
  %1752 = vmatprep.subr.mxu0 0.0
  %1753 = vmatpush2.msra.mxu0 0.0
  %1754 = vmatprep.subr.mxu0 0.0
  %1755 = vmatpush2.msra.mxu0 0.0
  %1756 = vmatprep.subr.mxu0 0.0
  %1757 = vmatpush2.msra.mxu0 0.0
  %1758 = vmatprep.subr.mxu0 0.0
  %1759 = vmatpush2.msra.mxu0 0.0
  %1760 = vmatprep.subr.mxu0 0.0
  %1761 = vmatpush2.msra.mxu0 0.0
  %1762 = vmatprep.subr.mxu0 0.0
  %1763 = vmatpush2.msra.mxu0 0.0
  %1764 = vmatprep.subr.mxu0 0.0
  %1765 = vmatpush2.msra.mxu0 0.0
  %1766 = vmatprep.subr.mxu0 0.0
  %1767 = vmatpush2.msra.mxu0 0.0
  %1768 = vmatprep.subr.mxu0 0.0
  %1769 = vmatpush2.msra.mxu0 0.0
  %1770 = vmatprep.subr.mxu0 0.0
  %1771 = vmatpush2.msra.mxu0 0.0
  %1772 = vmatprep.subr.mxu0 0.0
  %1773 = vmatpush2.msra.mxu0 0.0
  %1774 = vmatprep.subr.mxu0 0.0
  %1775 = vmatpush2.msra.mxu0 0.0
  %1776 = vmatprep.subr.mxu0 0.0
  %1777 = vmatpush2.msra.mxu0 0.0
  %1778 = vmatprep.subr.mxu0 0.0
  %1779 = vmatpush2.msra.mxu0 0.0
  %1780 = vmatprep.subr.mxu0 0.0
  %1781 = vmatpush2.msra.mxu0 0.0
  %1782 = vmatprep.mubr.f32.mxu0 0.0
  %1783 = vmatmul.mubr.f32.gmra.mxu0 %v1716
  %v1784 = vpop.f32.mrf.mxu0
  %v1785 = vadd.f32 %v1316, %v1784
  %v1786 = vpop.f32.mrf.mxu0
  %1787 = vdwg.mxu0
  %v1788 = vxor.u32 %v1785, 2147483648
  %v1789 = vmul.f32 %v1788, 1.442695
  %v1790 = vpow.pop %v1789
  %v1791 = vadd.f32 %v1790, 1.0
  %v1792 = vrcp.pop %v1791
  %v1793 = vmul.f32 1.0, %v1792
  %v1794 = vtanh.pop %v1785
  %v1795 = vmul.f32 %v1793, %v1706
  %1797 = vrot.lane.b32.xlu0 %v1794, 32
  %v1798 = vpop.permute.xlu0 %1797
  %v1800 = vmul.f32 %v1793, %v1798
  %1802 = vrot.lane.b32.xlu0 %v1800, 32
  %v1803 = vpop.permute.xlu0 %1802
  %v1805 = vadd.f32 %v1795, %v1803
  %v1806 = vtanh.pop %v1805
  %1808 = vrot.lane.b32.xlu0 %v1806, 32
  %v1809 = vpop.permute.xlu0 %1808
  %v1811 = vmul.f32 %v1793, %v1809
  %v1812 = vld [vmem:[%s1 + $0xa3] sm:$0x1]
  %v1813 = vlaneseq
  %v1814 = vshrl.u32 %v1813, 7
  %v1815 = vsub.s32 0, %v1814
  %v1816 = vrot.slane %v1812, %v1815
  %1818 = vrot.lane.b32.xlu0 %v1811, 64
  %v1819 = vpop.permute.xlu0 %1818
  %1824 = vrot.lane.b32.xlu0 %v1121, 96
  %v1825 = vpop.permute.xlu0 %1824
  %1826 = vrot.lane.b32.xlu0 %v1122, 96
  %v1827 = vpop.permute.xlu0 %1826
  %1828 = vrot.lane.b32.xlu0 %v1123, 96
  %v1829 = vpop.permute.xlu0 %1828
  %1830 = vrot.lane.b32.xlu0 %v1124, 96
  %v1831 = vpop.permute.xlu0 %1830
  %v1836 = vsel %vm16, %v1819, 0
  %1838 = vmatprep.subr.mxu0 0.0
  %1839 = vmatpush1.msra.mxu0 0.0
  %1840 = vmatprep.subr.mxu0 0.0
  %1841 = vmatpush1.msra.mxu0 0.0
  %1842 = vmatprep.subr.mxu0 0.0
  %1843 = vmatpush1.msra.mxu0 0.0
  %1844 = vmatprep.subr.mxu0 0.0
  %1845 = vmatpush1.msra.mxu0 0.0
  %1846 = vmatprep.subr.mxu0 0.0
  %1847 = vmatpush1.msra.mxu0 0.0
  %1848 = vmatprep.subr.mxu0 0.0
  %1849 = vmatpush1.msra.mxu0 0.0
  %1850 = vmatprep.subr.mxu0 0.0
  %1851 = vmatpush1.msra.mxu0 0.0
  %1852 = vmatprep.subr.mxu0 0.0
  %1853 = vmatpush1.msra.mxu0 0.0
  %1854 = vmatprep.subr.mxu0 0.0
  %1855 = vmatpush1.msra.mxu0 0.0
  %1856 = vmatprep.subr.mxu0 0.0
  %1857 = vmatpush1.msra.mxu0 0.0
  %1858 = vmatprep.subr.mxu0 0.0
  %1859 = vmatpush1.msra.mxu0 0.0
  %1860 = vmatprep.subr.mxu0 0.0
  %1861 = vmatpush1.msra.mxu0 0.0
  %1862 = vmatprep.subr.mxu0 0.0
  %1863 = vmatpush1.msra.mxu0 %v1831
  %1864 = vmatprep.subr.mxu0 0.0
  %1865 = vmatpush1.msra.mxu0 %v1829
  %1866 = vmatprep.subr.mxu0 0.0
  %1867 = vmatpush1.msra.mxu0 %v1827
  %1868 = vmatprep.subr.mxu0 0.0
  %1869 = vmatpush1.msra.mxu0 %v1825
  %1870 = vmatprep.subr.mxu0 0.0
  %1871 = vmatpush2.msra.mxu0 0.0
  %1872 = vmatprep.subr.mxu0 0.0
  %1873 = vmatpush2.msra.mxu0 0.0
  %1874 = vmatprep.subr.mxu0 0.0
  %1875 = vmatpush2.msra.mxu0 0.0
  %1876 = vmatprep.subr.mxu0 0.0
  %1877 = vmatpush2.msra.mxu0 0.0
  %1878 = vmatprep.subr.mxu0 0.0
  %1879 = vmatpush2.msra.mxu0 0.0
  %1880 = vmatprep.subr.mxu0 0.0
  %1881 = vmatpush2.msra.mxu0 0.0
  %1882 = vmatprep.subr.mxu0 0.0
  %1883 = vmatpush2.msra.mxu0 0.0
  %1884 = vmatprep.subr.mxu0 0.0
  %1885 = vmatpush2.msra.mxu0 0.0
  %1886 = vmatprep.subr.mxu0 0.0
  %1887 = vmatpush2.msra.mxu0 0.0
  %1888 = vmatprep.subr.mxu0 0.0
  %1889 = vmatpush2.msra.mxu0 0.0
  %1890 = vmatprep.subr.mxu0 0.0
  %1891 = vmatpush2.msra.mxu0 0.0
  %1892 = vmatprep.subr.mxu0 0.0
  %1893 = vmatpush2.msra.mxu0 0.0
  %1894 = vmatprep.subr.mxu0 0.0
  %1895 = vmatpush2.msra.mxu0 0.0
  %1896 = vmatprep.subr.mxu0 0.0
  %1897 = vmatpush2.msra.mxu0 0.0
  %1898 = vmatprep.subr.mxu0 0.0
  %1899 = vmatpush2.msra.mxu0 0.0
  %1900 = vmatprep.subr.mxu0 0.0
  %1901 = vmatpush2.msra.mxu0 0.0
  %1902 = vmatprep.mubr.f32.mxu0 0.0
  %1903 = vmatmul.mubr.f32.gmra.mxu0 %v1320
  %v1904 = vpop.f32.mrf.mxu0
  %v1905 = vadd.f32 %v1816, %v1904
  %v1906 = vpop.f32.mrf.mxu0
  %1907 = vmatprep.mubr.f32.mxu0 0.0
  %1908 = vmatmul.mubr.f32.gmra.mxu0 %v1419
  %v1909 = vpop.f32.mrf.mxu0
  %v1910 = vadd.f32 %v1816, %v1909
  %v1911 = vpop.f32.mrf.mxu0
  %1912 = vmatprep.mubr.f32.mxu0 0.0
  %1913 = vmatmul.mubr.f32.gmra.mxu0 %v1518
  %v1914 = vpop.f32.mrf.mxu0
  %v1915 = vadd.f32 %v1816, %v1914
  %v1916 = vpop.f32.mrf.mxu0
  %1917 = vmatprep.mubr.f32.mxu0 0.0
  %1918 = vmatmul.mubr.f32.gmra.mxu0 %v1617
  %v1919 = vpop.f32.mrf.mxu0
  %v1920 = vadd.f32 %v1816, %v1919
  %v1921 = vpop.f32.mrf.mxu0
  %1922 = vmatprep.mubr.f32.mxu0 0.0
  %1923 = vmatmul.mubr.f32.gmra.mxu0 %v1716
  %v1924 = vpop.f32.mrf.mxu0
  %v1925 = vadd.f32 %v1816, %v1924
  %v1926 = vpop.f32.mrf.mxu0
  %1927 = vmatprep.mubr.f32.mxu0 0.0
  %1928 = vmatmul.mubr.f32.gmra.mxu0 %v1836
  %v1929 = vpop.f32.mrf.mxu0
  %v1930 = vadd.f32 %v1816, %v1929
  %v1931 = vpop.f32.mrf.mxu0
  %1932 = vdwg.mxu0
  %v1933 = vld [vmem:[%s0 + $0x88] sm:$0xff]
  %v1934 = vadd.f32 %v1933, %v1905
  %v1935 = vadd.f32 %v1934, %v1910
  %v1936 = vadd.f32 %v1935, %v1915
  %v1937 = vadd.f32 %v1936, %v1920
  %v1938 = vadd.f32 %v1937, %v1925
  %v1939 = vadd.f32 %v1938, %v1930
  %vm1940 = vcmask 15360
  %1941 = vst.msk [vmem:[%s2] sm:$0xff] %vm1940, %v1934
  %1942 = vst.msk [vmem:[%s2 + $0x8] sm:$0xff] %vm1940, %v1935
  %1943 = vst.msk [vmem:[%s2 + $0x10] sm:$0xff] %vm1940, %v1936
  %1944 = vst.msk [vmem:[%s2 + $0x18] sm:$0xff] %vm1940, %v1937
  %1945 = vst.msk [vmem:[%s2 + $0x20] sm:$0xff] %vm1940, %v1938
  %1946 = vst.msk [vmem:[%s2 + $0x28] sm:$0xff] %vm1940, %v1939
  // Predicated region
  $region10: #{_cam_forward_core.1} parent=0 // pred_check
    _
  $region11: #{_cam_forward_core.1} parent=0 // pred_check_branch
    %1948 = sbr.rel (0) target = $region13
  $region12: #{_cam_forward_core.1} parent=0 // pred_region
    _
  $region13: #{_cam_forward_core.1} parent=0 // pred_fallthru
    _
  // Predicated region
  $region14: #{_cam_forward_core.1} parent=0 // pred_check
    _
  $region15: #{_cam_forward_core.1} parent=0 // pred_check_branch
    %1950 = sbr.rel (0) target = $region17
  $region16: #{_cam_forward_core.1} parent=0 // pred_region
    _
  $region17: #{_cam_forward_core.1} parent=0 // pred_fallthru
    _

</llo_original>
